<compile_context>
chip_gen: v7x
topology: tpu7x:2x2x1
jax: 0.10.0
libtpu: 0.0.40
codegen_flags: <defaults>
</compile_context>

<pallas_src>
from functools import partial

import jax
import jax.numpy as jnp
from jax import lax
from jax.experimental import pallas as pl
from jax.experimental.pallas import tpu as pltpu


def _lmodule_kernel(H, W, Cm, pad,
                    xt_ref, xn_ref, chm_ref, cml_ref, cmr_ref,
                    w1_ref, t1_ref,
                    w2_ref, t2_ref,
                    w3_ref, t3_ref,
                    out_ref, hbuf_ref):
    """One time step (all B images): shift -> 1x1 -> 3x3 (im2col) -> 1x1 -> gate.

    BN scales are pre-folded into w1/w2/w3; t1/t2/t3 carry conv-bias + BN shift.
    """
    M = H * W
    B = xt_ref.shape[1]

    # On the last time step the "next" block is clamped to t; mask its contribution.
    tmask = (pl.program_id(0) + 1 < pl.num_programs(0)).astype(jnp.float32)

    chm = chm_ref[...]            # (C, 1)  1.0 for the first C//2 channels
    cml = cml_ref[...]            # (1, M)  1.0 where column x-1 stays inside the row
    cmr = cmr_ref[...]            # (1, M)  1.0 where column x+1 stays inside the row
    w1 = w1_ref[...]; t1 = t1_ref[...]
    w2 = w2_ref[...]; t2 = t2_ref[...]
    w3 = w3_ref[...]; t3 = t3_ref[...]

    # Zero only the halo of the flat staging buffer; its centre is overwritten below.
    hbuf_ref[:, :pad] = jnp.zeros((Cm, pad), jnp.float32)
    hbuf_ref[:, pad + M:] = jnp.zeros((Cm, pad), jnp.float32)

    # Hoisted, loop-invariant channel masks.
    take_next = chm * tmask       # (C, 1)
    keep_cur = 1.0 - chm          # (C, 1)

    for b in range(B):            # static unroll over the small batch dim
        xt = xt_ref[0, b].astype(jnp.float32)              # (C, M)  x at t
        xn = xn_ref[0, b].astype(jnp.float32)              # (C, M)  x at t+1
        xs = xn * take_next + xt * keep_cur                # fused shift_channels

        # ---- stage 1: 1x1 conv (channel matmul, BN scale folded in) + shift ----
        h1 = jnp.dot(w1, xs, preferred_element_type=jnp.float32) + t1      # (Cm, M)
        hbuf_ref[:, pl.ds(pad, M)] = h1                    # lane-aligned store

        # ---- stage 2: 3x3 conv via im2col -> single K=9*Cm matmul + shift ----
        taps = []
        for dy in (-1, 0, 1):
            for dx in (-1, 0, 1):
                # Shifted copy: rows that leave the image vertically hit the zero
                # halo; horizontal wrap-around is zeroed by the column masks.
                sh = hbuf_ref[:, pl.ds(pad + dy * W + dx, M)]               # (Cm, M)
                if dx == -1:
                    sh = sh * cml
                elif dx == 1:
                    sh = sh * cmr
                taps.append(sh)
        patch = jnp.concatenate(taps, axis=0)                              # (9*Cm, M)
        h2 = jnp.dot(w2, patch, preferred_element_type=jnp.float32) + t2   # (Cm, M)

        # ---- stage 3: 1x1 conv + shift + sigmoid gate on the original x ----
        g = jnp.dot(w3, h2, preferred_element_type=jnp.float32) + t3       # (C, M)
        gate = pl.reciprocal(1.0 + jnp.exp(-g))   # exact sigmoid (exp + recip on EUP)
        out_ref[0, b] = (gate * xt).astype(out_ref.dtype)


def lmodule_forward(x, params):
    """x: (T, B, C, H, W) float32.  Returns the same shape."""
    T, B, C, H, W = x.shape
    Cm = params["w1"].shape[0]
    M = H * W
    PAD = 128                     # halo >= W+1; 128 keeps the h1 store lane-aligned

    x3 = x.reshape(T, B, C, M)    # free reshape; no HBM relayout

    # Fold the per-output-channel BN scale into the conv weights (wrapper-side, once);
    # the kernel then only does matmul + bias-add.
    w1f = params["w1"] * params["s1"]            # (Cm, C)
    w2f = params["w2"] * params["s2"]            # (Cm, 9*Cm)
    w3f = params["w3"] * params["s3"]            # (C, Cm)

    # Small constant masks built in the wrapper (no in-kernel integer div/mod needed).
    xcol = jnp.arange(M, dtype=jnp.int32) % W
    cml = (xcol >= 1).astype(jnp.float32).reshape(1, M)
    cmr = (xcol <= W - 2).astype(jnp.float32).reshape(1, M)
    chm = (jnp.arange(C, dtype=jnp.int32) < C // 2).astype(jnp.float32).reshape(C, 1)

    kernel = partial(_lmodule_kernel, H, W, Cm, PAD)
    xmap = lambda t: (t, 0, 0, 0)
    xnext_map = lambda t: (jnp.minimum(t + 1, T - 1), 0, 0, 0)
    wmap = lambda t: (0, 0)

    out = pl.pallas_call(
        kernel,
        out_shape=jax.ShapeDtypeStruct((T, B, C, M), x.dtype),
        grid_spec=pltpu.PrefetchScalarGridSpec(
            num_scalar_prefetch=0,
            grid=(T,),
            in_specs=[
                pl.BlockSpec((1, B, C, M), xmap),        # x at t
                pl.BlockSpec((1, B, C, M), xnext_map),   # x at t+1 (clamped, masked in-kernel)
                pl.BlockSpec((C, 1), wmap),              # channel-shift mask
                pl.BlockSpec((1, M), wmap),              # column mask for dx = -1
                pl.BlockSpec((1, M), wmap),              # column mask for dx = +1
                pl.BlockSpec((Cm, C), wmap),             # w1 * s1  (Cout, Cin)
                pl.BlockSpec((Cm, 1), wmap),             # t1
                pl.BlockSpec((Cm, 9 * Cm), wmap),        # w2 * s2  (Cout, 9*Cin) im2col layout
                pl.BlockSpec((Cm, 1), wmap),             # t2
                pl.BlockSpec((C, Cm), wmap),             # w3 * s3  (Cout, Cin)
                pl.BlockSpec((C, 1), wmap),              # t3
            ],
            out_specs=pl.BlockSpec((1, B, C, M), xmap),
            scratch_shapes=[pltpu.VMEM((Cm, M + 2 * PAD), jnp.float32)],
        ),
        compiler_params=pltpu.CompilerParams(dimension_semantics=("parallel",)),
    )(x3, x3, chm, cml, cmr,
      w1f, params["t1"], w2f, params["t2"], w3f, params["t3"])

    return out.reshape(T, B, C, H, W)


def make_params(key, C, Cm, eps=1e-5):
    """Deterministic synthetic parameters; conv bias + BN fused into per-channel (scale, shift)."""
    ks = jax.random.split(key, 9)
    w1_t = 0.1 * jax.random.normal(ks[0], (Cm, C, 1, 1), jnp.float32)   # torch (Cout,Cin,1,1)
    b1 = 0.1 * jax.random.normal(ks[1], (Cm,), jnp.float32)
    w2_t = 0.1 * jax.random.normal(ks[2], (Cm, Cm, 3, 3), jnp.float32)  # torch (Cout,Cin,3,3)
    b2 = 0.1 * jax.random.normal(ks[3], (Cm,), jnp.float32)
    w3_t = 0.1 * jax.random.normal(ks[4], (C, Cm, 1, 1), jnp.float32)   # torch (Cout,Cin,1,1)
    b3 = 0.1 * jax.random.normal(ks[5], (C,), jnp.float32)

    def bn_params(k, n):
        g = 1.0 + 0.1 * jax.random.normal(k, (n,), jnp.float32)
        be = 0.1 * jax.random.normal(jax.random.fold_in(k, 1), (n,), jnp.float32)
        mu = 0.1 * jax.random.normal(jax.random.fold_in(k, 2), (n,), jnp.float32)
        var = 1.0 + 0.1 * jnp.abs(jax.random.normal(jax.random.fold_in(k, 3), (n,), jnp.float32))
        return g, be, mu, var

    def fuse(b, g, be, mu, var):
        s = g / jnp.sqrt(var + eps)
        t = (b - mu) * s + be
        return s.reshape(-1, 1), t.reshape(-1, 1)     # (n, 1): broadcast over the lane axis

    s1, t1 = fuse(b1, *bn_params(ks[6], Cm))
    s2, t2 = fuse(b2, *bn_params(ks[7], Cm))
    s3, t3 = fuse(b3, *bn_params(ks[8], C))

    return dict(
        # channel-major weights (Cout rows, contraction on the trailing axis)
        w1=w1_t[:, :, 0, 0],                                        # (Cm, C)
        # im2col layout: rows ordered tap-major ((dy,dx) -> ky*3+kx), Cin minor
        w2=jnp.transpose(w2_t, (0, 2, 3, 1)).reshape(Cm, 9 * Cm),   # (Cm, 9*Cm)
        w3=w3_t[:, :, 0, 0],                                        # (C, Cm)
        s1=s1, t1=t1, s2=s2, t2=t2, s3=s3, t3=t3,
    )


def _reference_forward(x, params):
    """Pure-JAX reference (NCHW convs, conv -> BN applied separately)."""
    T, B, C, H, W = x.shape
    Cm = params["w1"].shape[0]
    half = C // 2
    first = jnp.concatenate([x[1:, :, :half], jnp.zeros_like(x[:1, :, :half])], axis=0)
    xs = jnp.concatenate([first, x[:, :, half:]], axis=2)

    N = T * B
    xs4 = xs.reshape(N, C, H, W)
    xo4 = x.reshape(N, C, H, W)
    dn = ("NCHW", "OIHW", "NCHW")

    w1 = params["w1"].reshape(Cm, C, 1, 1)
    w2 = params["w2"].reshape(Cm, 3, 3, Cm).transpose(0, 3, 1, 2)   # -> OIHW
    w3 = params["w3"].reshape(C, Cm, 1, 1)

    def bn(h, s, t):
        return h * s.reshape(1, -1, 1, 1) + t.reshape(1, -1, 1, 1)

    h = lax.conv_general_dilated(xs4, w1, (1, 1), "VALID", dimension_numbers=dn)
    h = bn(h, params["s1"], params["t1"])
    h = lax.conv_general_dilated(h, w2, (1, 1), "SAME", dimension_numbers=dn)
    h = bn(h, params["s2"], params["t2"])
    h = lax.conv_general_dilated(h, w3, (1, 1), "VALID", dimension_numbers=dn)
    h = bn(h, params["s3"], params["t3"])
    out = jax.nn.sigmoid(h) * xo4
    return out.reshape(T, B, C, H, W)


if __name__ == "__main__":
    T, B, C, H, W = 4, 2, 8, 16, 16
    Cm = 16

    key = jax.random.PRNGKey(0)
    kx, kp = jax.random.split(key)
    x = jax.random.normal(kx, (T, B, C, H, W), jnp.float32)
    params = make_params(kp, C, Cm)

    out = jax.jit(lmodule_forward)(x, params)
    out = jax.block_until_ready(out)

    ref = _reference_forward(x, params)
    assert out.shape == (T, B, C, H, W)
    assert jnp.allclose(out, ref, atol=1e-4, rtol=1e-4), "mismatch vs reference"

    print("KERNEL_OK")
</pallas_src>

<mosaic_0001>
module attributes {stable_mosaic.version = 11 : i64} {
  func.func @_lmodule_kernel(%arg0: i32, %arg1: memref<1x2x8x256xf32, #tpu.memory_space<vmem>>, %arg2: memref<1x2x8x256xf32, #tpu.memory_space<vmem>>, %arg3: memref<8x1xf32, #tpu.memory_space<vmem>>, %arg4: memref<1x256xf32, #tpu.memory_space<vmem>>, %arg5: memref<1x256xf32, #tpu.memory_space<vmem>>, %arg6: memref<16x8xf32, #tpu.memory_space<vmem>>, %arg7: memref<16x1xf32, #tpu.memory_space<vmem>>, %arg8: memref<16x144xf32, #tpu.memory_space<vmem>>, %arg9: memref<16x1xf32, #tpu.memory_space<vmem>>, %arg10: memref<8x16xf32, #tpu.memory_space<vmem>>, %arg11: memref<8x1xf32, #tpu.memory_space<vmem>>, %arg12: memref<1x2x8x256xf32, #tpu.memory_space<vmem>>, %arg13: memref<16x512xf32, #tpu.memory_space<vmem>>) attributes {dimension_semantics = [#tpu.dimension_semantics<parallel>], iteration_bounds = array<i64: 4>, scalar_prefetch = 0 : i64, scratch_operands = 1 : i64, tpu.core_type = #tpu.core_type<tc>, window_params = [{transform_indices = @transform_0, window_bounds = array<i64: 1, 2, 8, 256>}, {transform_indices = @transform_1, window_bounds = array<i64: 1, 2, 8, 256>}, {pipeline_mode = #tpu.pipeline_mode<synchronous>, transform_indices = @transform_2, window_bounds = array<i64: 8, 1>}, {pipeline_mode = #tpu.pipeline_mode<synchronous>, transform_indices = @transform_3, window_bounds = array<i64: 1, 256>}, {pipeline_mode = #tpu.pipeline_mode<synchronous>, transform_indices = @transform_4, window_bounds = array<i64: 1, 256>}, {pipeline_mode = #tpu.pipeline_mode<synchronous>, transform_indices = @transform_5, window_bounds = array<i64: 16, 8>}, {pipeline_mode = #tpu.pipeline_mode<synchronous>, transform_indices = @transform_6, window_bounds = array<i64: 16, 1>}, {pipeline_mode = #tpu.pipeline_mode<synchronous>, transform_indices = @transform_7, window_bounds = array<i64: 16, 144>}, {pipeline_mode = #tpu.pipeline_mode<synchronous>, transform_indices = @transform_8, window_bounds = array<i64: 16, 1>}, {pipeline_mode = #tpu.pipeline_mode<synchronous>, transform_indices = @transform_9, window_bounds = array<i64: 8, 16>}, {pipeline_mode = #tpu.pipeline_mode<synchronous>, transform_indices = @transform_10, window_bounds = array<i64: 8, 1>}, {transform_indices = @transform_11, window_bounds = array<i64: 1, 2, 8, 256>}]} {
    %c1_i32 = arith.constant 1 : i32
    %0 = arith.addi %arg0, %c1_i32 : i32
    %c4_i32 = arith.constant 4 : i32
    %1 = arith.cmpi slt, %0, %c4_i32 : i32
    %2 = arith.extui %1 : i1 to i32
    %3 = arith.sitofp %2 : i32 to f32
    %c0 = arith.constant 0 : index
    %c0_0 = arith.constant 0 : index
    %4 = vector.load %arg3[%c0, %c0_0] : memref<8x1xf32, #tpu.memory_space<vmem>>, vector<8x1xf32>
    %c0_1 = arith.constant 0 : index
    %c0_2 = arith.constant 0 : index
    %5 = vector.load %arg4[%c0_1, %c0_2] : memref<1x256xf32, #tpu.memory_space<vmem>>, vector<1x256xf32>
    %c0_3 = arith.constant 0 : index
    %c0_4 = arith.constant 0 : index
    %6 = vector.load %arg5[%c0_3, %c0_4] : memref<1x256xf32, #tpu.memory_space<vmem>>, vector<1x256xf32>
    %c0_5 = arith.constant 0 : index
    %c0_6 = arith.constant 0 : index
    %7 = vector.load %arg6[%c0_5, %c0_6] : memref<16x8xf32, #tpu.memory_space<vmem>>, vector<16x8xf32>
    %c0_7 = arith.constant 0 : index
    %c0_8 = arith.constant 0 : index
    %8 = vector.load %arg7[%c0_7, %c0_8] : memref<16x1xf32, #tpu.memory_space<vmem>>, vector<16x1xf32>
    %c0_9 = arith.constant 0 : index
    %c0_10 = arith.constant 0 : index
    %9 = vector.load %arg8[%c0_9, %c0_10] : memref<16x144xf32, #tpu.memory_space<vmem>>, vector<16x144xf32>
    %c0_11 = arith.constant 0 : index
    %c0_12 = arith.constant 0 : index
    %10 = vector.load %arg9[%c0_11, %c0_12] : memref<16x1xf32, #tpu.memory_space<vmem>>, vector<16x1xf32>
    %c0_13 = arith.constant 0 : index
    %c0_14 = arith.constant 0 : index
    %11 = vector.load %arg10[%c0_13, %c0_14] : memref<8x16xf32, #tpu.memory_space<vmem>>, vector<8x16xf32>
    %c0_15 = arith.constant 0 : index
    %c0_16 = arith.constant 0 : index
    %12 = vector.load %arg11[%c0_15, %c0_16] : memref<8x1xf32, #tpu.memory_space<vmem>>, vector<8x1xf32>
    %cst = arith.constant 0.000000e+00 : f32
    %13 = vector.broadcast %cst : f32 to vector<16x128xf32>
    %c0_17 = arith.constant 0 : index
    %c0_18 = arith.constant 0 : index
    %14 = vector.load %arg13[%c0_17, %c0_18] : memref<16x512xf32, #tpu.memory_space<vmem>>, vector<16x128xf32>
    tpu.vector_store %arg13[%c0_17, %c0_18], %13 {strides = array<i32>} : memref<16x512xf32, #tpu.memory_space<vmem>>, vector<16x128xf32>,
    %cst_19 = arith.constant 0.000000e+00 : f32
    %15 = vector.broadcast %cst_19 : f32 to vector<16x128xf32>
    %c0_20 = arith.constant 0 : index
    %c384 = arith.constant 384 : index
    %16 = vector.load %arg13[%c0_20, %c384] : memref<16x512xf32, #tpu.memory_space<vmem>>, vector<16x128xf32>
    tpu.vector_store %arg13[%c0_20, %c384], %15 {strides = array<i32>} : memref<16x512xf32, #tpu.memory_space<vmem>>, vector<16x128xf32>,
    %17 = vector.broadcast %3 : f32 to vector<8x1xf32>
    %18 = arith.mulf %4, %17 : vector<8x1xf32>
    %cst_21 = arith.constant 1.000000e+00 : f32
    %19 = vector.broadcast %cst_21 : f32 to vector<8x1xf32>
    %20 = arith.subf %19, %4 : vector<8x1xf32>
    %c0_22 = arith.constant 0 : index
    %c0_23 = arith.constant 0 : index
    %c0_24 = arith.constant 0 : index
    %c0_25 = arith.constant 0 : index
    %21 = vector.load %arg1[%c0_22, %c0_23, %c0_24, %c0_25] : memref<1x2x8x256xf32, #tpu.memory_space<vmem>>, vector<1x1x8x256xf32>
    %22 = vector.shape_cast %21 : vector<1x1x8x256xf32> to vector<8x256xf32>
    %c0_26 = arith.constant 0 : index
    %c0_27 = arith.constant 0 : index
    %c0_28 = arith.constant 0 : index
    %c0_29 = arith.constant 0 : index
    %23 = vector.load %arg2[%c0_26, %c0_27, %c0_28, %c0_29] : memref<1x2x8x256xf32, #tpu.memory_space<vmem>>, vector<1x1x8x256xf32>
    %24 = vector.shape_cast %23 : vector<1x1x8x256xf32> to vector<8x256xf32>
    %25 = vector.broadcast %18 : vector<8x1xf32> to vector<8x256xf32>
    %26 = arith.mulf %24, %25 : vector<8x256xf32>
    %27 = vector.broadcast %20 : vector<8x1xf32> to vector<8x256xf32>
    %28 = arith.mulf %22, %27 : vector<8x256xf32>
    %29 = arith.addf %26, %28 : vector<8x256xf32>
    %cst_30 = arith.constant dense<0.000000e+00> : vector<16x256xf32>
    %30 = tpu.matmul %7, %29, %cst_30 {dimension_numbers = #tpu.dot_dimension_numbers<[1], [0], [0], [1], [0, 0, 1, 1], [], []>} : vector<16x8xf32>, vector<8x256xf32>, vector<16x256xf32> -> vector<16x256xf32>
    %31 = vector.broadcast %8 : vector<16x1xf32> to vector<16x256xf32>
    %32 = arith.addf %30, %31 : vector<16x256xf32>
    %c0_31 = arith.constant 0 : index
    %c128 = arith.constant 128 : index
    %33 = vector.load %arg13[%c0_31, %c128] : memref<16x512xf32, #tpu.memory_space<vmem>>, vector<16x256xf32>
    tpu.vector_store %arg13[%c0_31, %c128], %32 {strides = array<i32>} : memref<16x512xf32, #tpu.memory_space<vmem>>, vector<16x256xf32>,
    %c0_32 = arith.constant 0 : index
    %c111 = arith.constant 111 : index
    %34 = vector.load %arg13[%c0_32, %c111] : memref<16x512xf32, #tpu.memory_space<vmem>>, vector<16x256xf32>
    %35 = vector.broadcast %5 : vector<1x256xf32> to vector<16x256xf32>
    %36 = arith.mulf %34, %35 : vector<16x256xf32>
    %c0_33 = arith.constant 0 : index
    %c112 = arith.constant 112 : index
    %37 = vector.load %arg13[%c0_33, %c112] : memref<16x512xf32, #tpu.memory_space<vmem>>, vector<16x256xf32>
    %c0_34 = arith.constant 0 : index
    %c113 = arith.constant 113 : index
    %38 = vector.load %arg13[%c0_34, %c113] : memref<16x512xf32, #tpu.memory_space<vmem>>, vector<16x256xf32>
    %39 = vector.broadcast %6 : vector<1x256xf32> to vector<16x256xf32>
    %40 = arith.mulf %38, %39 : vector<16x256xf32>
    %c0_35 = arith.constant 0 : index
    %c127 = arith.constant 127 : index
    %41 = vector.load %arg13[%c0_35, %c127] : memref<16x512xf32, #tpu.memory_space<vmem>>, vector<16x256xf32>
    %42 = vector.broadcast %5 : vector<1x256xf32> to vector<16x256xf32>
    %43 = arith.mulf %41, %42 : vector<16x256xf32>
    %c0_36 = arith.constant 0 : index
    %c128_37 = arith.constant 128 : index
    %44 = vector.load %arg13[%c0_36, %c128_37] : memref<16x512xf32, #tpu.memory_space<vmem>>, vector<16x256xf32>
    %c0_38 = arith.constant 0 : index
    %c129 = arith.constant 129 : index
    %45 = vector.load %arg13[%c0_38, %c129] : memref<16x512xf32, #tpu.memory_space<vmem>>, vector<16x256xf32>
    %46 = vector.broadcast %6 : vector<1x256xf32> to vector<16x256xf32>
    %47 = arith.mulf %45, %46 : vector<16x256xf32>
    %c0_39 = arith.constant 0 : index
    %c143 = arith.constant 143 : index
    %48 = vector.load %arg13[%c0_39, %c143] : memref<16x512xf32, #tpu.memory_space<vmem>>, vector<16x256xf32>
    %49 = vector.broadcast %5 : vector<1x256xf32> to vector<16x256xf32>
    %50 = arith.mulf %48, %49 : vector<16x256xf32>
    %c0_40 = arith.constant 0 : index
    %c144 = arith.constant 144 : index
    %51 = vector.load %arg13[%c0_40, %c144] : memref<16x512xf32, #tpu.memory_space<vmem>>, vector<16x256xf32>
    %c0_41 = arith.constant 0 : index
    %c145 = arith.constant 145 : index
    %52 = vector.load %arg13[%c0_41, %c145] : memref<16x512xf32, #tpu.memory_space<vmem>>, vector<16x256xf32>
    %53 = vector.broadcast %6 : vector<1x256xf32> to vector<16x256xf32>
    %54 = arith.mulf %52, %53 : vector<16x256xf32>
    %55 = tpu.concatenate %36, %37, %40, %43, %44, %47, %50, %51, %54 in 0 : vector<16x256xf32>, vector<16x256xf32>, vector<16x256xf32>, vector<16x256xf32>, vector<16x256xf32>, vector<16x256xf32>, vector<16x256xf32>, vector<16x256xf32>, vector<16x256xf32> -> vector<144x256xf32>
    %cst_42 = arith.constant dense<0.000000e+00> : vector<16x256xf32>
    %56 = tpu.matmul %9, %55, %cst_42 {dimension_numbers = #tpu.dot_dimension_numbers<[1], [0], [0], [1], [0, 0, 1, 1], [], []>} : vector<16x144xf32>, vector<144x256xf32>, vector<16x256xf32> -> vector<16x256xf32>
    %57 = vector.broadcast %10 : vector<16x1xf32> to vector<16x256xf32>
    %58 = arith.addf %56, %57 : vector<16x256xf32>
    %cst_43 = arith.constant dense<0.000000e+00> : vector<8x256xf32>
    %59 = tpu.matmul %11, %58, %cst_43 {dimension_numbers = #tpu.dot_dimension_numbers<[1], [0], [0], [1], [0, 0, 1, 1], [], []>} : vector<8x16xf32>, vector<16x256xf32>, vector<8x256xf32> -> vector<8x256xf32>
    %60 = vector.broadcast %12 : vector<8x1xf32> to vector<8x256xf32>
    %61 = arith.addf %59, %60 : vector<8x256xf32>
    %cst_44 = arith.constant 0.000000e+00 : f32
    %62 = vector.broadcast %cst_44 : f32 to vector<8x256xf32>
    %63 = arith.subf %62, %61 : vector<8x256xf32>
    %64 = math.exp %63 : vector<8x256xf32>
    %cst_45 = arith.constant 1.000000e+00 : f32
    %65 = vector.broadcast %cst_45 : f32 to vector<8x256xf32>
    %66 = arith.addf %65, %64 : vector<8x256xf32>
    %67 = tpu.reciprocal %66 : vector<8x256xf32> -> vector<8x256xf32>
    %68 = arith.mulf %67, %22 : vector<8x256xf32>
    %c0_46 = arith.constant 0 : index
    %c0_47 = arith.constant 0 : index
    %c0_48 = arith.constant 0 : index
    %c0_49 = arith.constant 0 : index
    %69 = vector.load %arg12[%c0_46, %c0_47, %c0_48, %c0_49] : memref<1x2x8x256xf32, #tpu.memory_space<vmem>>, vector<1x1x8x256xf32>
    %70 = vector.shape_cast %69 : vector<1x1x8x256xf32> to vector<8x256xf32>
    %71 = vector.shape_cast %68 : vector<8x256xf32> to vector<1x1x8x256xf32>
    tpu.vector_store %arg12[%c0_46, %c0_47, %c0_48, %c0_49], %71 {strides = array<i32>} : memref<1x2x8x256xf32, #tpu.memory_space<vmem>>, vector<1x1x8x256xf32>,
    %c0_50 = arith.constant 0 : index
    %c1 = arith.constant 1 : index
    %c0_51 = arith.constant 0 : index
    %c0_52 = arith.constant 0 : index
    %72 = vector.load %arg1[%c0_50, %c1, %c0_51, %c0_52] : memref<1x2x8x256xf32, #tpu.memory_space<vmem>>, vector<1x1x8x256xf32>
    %73 = vector.shape_cast %72 : vector<1x1x8x256xf32> to vector<8x256xf32>
    %c0_53 = arith.constant 0 : index
    %c1_54 = arith.constant 1 : index
    %c0_55 = arith.constant 0 : index
    %c0_56 = arith.constant 0 : index
    %74 = vector.load %arg2[%c0_53, %c1_54, %c0_55, %c0_56] : memref<1x2x8x256xf32, #tpu.memory_space<vmem>>, vector<1x1x8x256xf32>
    %75 = vector.shape_cast %74 : vector<1x1x8x256xf32> to vector<8x256xf32>
    %76 = vector.broadcast %18 : vector<8x1xf32> to vector<8x256xf32>
    %77 = arith.mulf %75, %76 : vector<8x256xf32>
    %78 = vector.broadcast %20 : vector<8x1xf32> to vector<8x256xf32>
    %79 = arith.mulf %73, %78 : vector<8x256xf32>
    %80 = arith.addf %77, %79 : vector<8x256xf32>
    %cst_57 = arith.constant dense<0.000000e+00> : vector<16x256xf32>
    %81 = tpu.matmul %7, %80, %cst_57 {dimension_numbers = #tpu.dot_dimension_numbers<[1], [0], [0], [1], [0, 0, 1, 1], [], []>} : vector<16x8xf32>, vector<8x256xf32>, vector<16x256xf32> -> vector<16x256xf32>
    %82 = vector.broadcast %8 : vector<16x1xf32> to vector<16x256xf32>
    %83 = arith.addf %81, %82 : vector<16x256xf32>
    %c0_58 = arith.constant 0 : index
    %c128_59 = arith.constant 128 : index
    %84 = vector.load %arg13[%c0_58, %c128_59] : memref<16x512xf32, #tpu.memory_space<vmem>>, vector<16x256xf32>
    tpu.vector_store %arg13[%c0_58, %c128_59], %83 {strides = array<i32>} : memref<16x512xf32, #tpu.memory_space<vmem>>, vector<16x256xf32>,
    %c0_60 = arith.constant 0 : index
    %c111_61 = arith.constant 111 : index
    %85 = vector.load %arg13[%c0_60, %c111_61] : memref<16x512xf32, #tpu.memory_space<vmem>>, vector<16x256xf32>
    %86 = vector.broadcast %5 : vector<1x256xf32> to vector<16x256xf32>
    %87 = arith.mulf %85, %86 : vector<16x256xf32>
    %c0_62 = arith.constant 0 : index
    %c112_63 = arith.constant 112 : index
    %88 = vector.load %arg13[%c0_62, %c112_63] : memref<16x512xf32, #tpu.memory_space<vmem>>, vector<16x256xf32>
    %c0_64 = arith.constant 0 : index
    %c113_65 = arith.constant 113 : index
    %89 = vector.load %arg13[%c0_64, %c113_65] : memref<16x512xf32, #tpu.memory_space<vmem>>, vector<16x256xf32>
    %90 = vector.broadcast %6 : vector<1x256xf32> to vector<16x256xf32>
    %91 = arith.mulf %89, %90 : vector<16x256xf32>
    %c0_66 = arith.constant 0 : index
    %c127_67 = arith.constant 127 : index
    %92 = vector.load %arg13[%c0_66, %c127_67] : memref<16x512xf32, #tpu.memory_space<vmem>>, vector<16x256xf32>
    %93 = vector.broadcast %5 : vector<1x256xf32> to vector<16x256xf32>
    %94 = arith.mulf %92, %93 : vector<16x256xf32>
    %c0_68 = arith.constant 0 : index
    %c128_69 = arith.constant 128 : index
    %95 = vector.load %arg13[%c0_68, %c128_69] : memref<16x512xf32, #tpu.memory_space<vmem>>, vector<16x256xf32>
    %c0_70 = arith.constant 0 : index
    %c129_71 = arith.constant 129 : index
    %96 = vector.load %arg13[%c0_70, %c129_71] : memref<16x512xf32, #tpu.memory_space<vmem>>, vector<16x256xf32>
    %97 = vector.broadcast %6 : vector<1x256xf32> to vector<16x256xf32>
    %98 = arith.mulf %96, %97 : vector<16x256xf32>
    %c0_72 = arith.constant 0 : index
    %c143_73 = arith.constant 143 : index
    %99 = vector.load %arg13[%c0_72, %c143_73] : memref<16x512xf32, #tpu.memory_space<vmem>>, vector<16x256xf32>
    %100 = vector.broadcast %5 : vector<1x256xf32> to vector<16x256xf32>
    %101 = arith.mulf %99, %100 : vector<16x256xf32>
    %c0_74 = arith.constant 0 : index
    %c144_75 = arith.constant 144 : index
    %102 = vector.load %arg13[%c0_74, %c144_75] : memref<16x512xf32, #tpu.memory_space<vmem>>, vector<16x256xf32>
    %c0_76 = arith.constant 0 : index
    %c145_77 = arith.constant 145 : index
    %103 = vector.load %arg13[%c0_76, %c145_77] : memref<16x512xf32, #tpu.memory_space<vmem>>, vector<16x256xf32>
    %104 = vector.broadcast %6 : vector<1x256xf32> to vector<16x256xf32>
    %105 = arith.mulf %103, %104 : vector<16x256xf32>
    %106 = tpu.concatenate %87, %88, %91, %94, %95, %98, %101, %102, %105 in 0 : vector<16x256xf32>, vector<16x256xf32>, vector<16x256xf32>, vector<16x256xf32>, vector<16x256xf32>, vector<16x256xf32>, vector<16x256xf32>, vector<16x256xf32>, vector<16x256xf32> -> vector<144x256xf32>
    %cst_78 = arith.constant dense<0.000000e+00> : vector<16x256xf32>
    %107 = tpu.matmul %9, %106, %cst_78 {dimension_numbers = #tpu.dot_dimension_numbers<[1], [0], [0], [1], [0, 0, 1, 1], [], []>} : vector<16x144xf32>, vector<144x256xf32>, vector<16x256xf32> -> vector<16x256xf32>
    %108 = vector.broadcast %10 : vector<16x1xf32> to vector<16x256xf32>
    %109 = arith.addf %107, %108 : vector<16x256xf32>
    %cst_79 = arith.constant dense<0.000000e+00> : vector<8x256xf32>
    %110 = tpu.matmul %11, %109, %cst_79 {dimension_numbers = #tpu.dot_dimension_numbers<[1], [0], [0], [1], [0, 0, 1, 1], [], []>} : vector<8x16xf32>, vector<16x256xf32>, vector<8x256xf32> -> vector<8x256xf32>
    %111 = vector.broadcast %12 : vector<8x1xf32> to vector<8x256xf32>
    %112 = arith.addf %110, %111 : vector<8x256xf32>
    %cst_80 = arith.constant 0.000000e+00 : f32
    %113 = vector.broadcast %cst_80 : f32 to vector<8x256xf32>
    %114 = arith.subf %113, %112 : vector<8x256xf32>
    %115 = math.exp %114 : vector<8x256xf32>
    %cst_81 = arith.constant 1.000000e+00 : f32
    %116 = vector.broadcast %cst_81 : f32 to vector<8x256xf32>
    %117 = arith.addf %116, %115 : vector<8x256xf32>
    %118 = tpu.reciprocal %117 : vector<8x256xf32> -> vector<8x256xf32>
    %119 = arith.mulf %118, %73 : vector<8x256xf32>
    %c0_82 = arith.constant 0 : index
    %c1_83 = arith.constant 1 : index
    %c0_84 = arith.constant 0 : index
    %c0_85 = arith.constant 0 : index
    %120 = vector.load %arg12[%c0_82, %c1_83, %c0_84, %c0_85] : memref<1x2x8x256xf32, #tpu.memory_space<vmem>>, vector<1x1x8x256xf32>
    %121 = vector.shape_cast %120 : vector<1x1x8x256xf32> to vector<8x256xf32>
    %122 = vector.shape_cast %119 : vector<8x256xf32> to vector<1x1x8x256xf32>
    tpu.vector_store %arg12[%c0_82, %c1_83, %c0_84, %c0_85], %122 {strides = array<i32>} : memref<1x2x8x256xf32, #tpu.memory_space<vmem>>, vector<1x1x8x256xf32>,
    return
  }
  func.func @transform_0(%arg0: i32) -> (i32, i32, i32, i32) {
    %c0_i32 = arith.constant 0 : i32
    %c0_i32_0 = arith.constant 0 : i32
    %c0_i32_1 = arith.constant 0 : i32
    %c0_i32_2 = arith.constant 0 : i32
    return %arg0, %c0_i32, %c0_i32_0, %c0_i32_1 : i32, i32, i32, i32
  }
  func.func @transform_1(%arg0: i32) -> (i32, i32, i32, i32) {
    %c1_i32 = arith.constant 1 : i32
    %0 = arith.addi %arg0, %c1_i32 : i32
    %c3_i32 = arith.constant 3 : i32
    %1 = arith.minsi %0, %c3_i32 : i32
    %c0_i32 = arith.constant 0 : i32
    %c0_i32_0 = arith.constant 0 : i32
    %c0_i32_1 = arith.constant 0 : i32
    %c0_i32_2 = arith.constant 0 : i32
    return %1, %c0_i32, %c0_i32_0, %c0_i32_1 : i32, i32, i32, i32
  }
  func.func @transform_2(%arg0: i32) -> (i32, i32) {
    %c0_i32 = arith.constant 0 : i32
    %c0_i32_0 = arith.constant 0 : i32
    %c0_i32_1 = arith.constant 0 : i32
    return %c0_i32, %c0_i32_0 : i32, i32
  }
  func.func @transform_3(%arg0: i32) -> (i32, i32) {
    %c0_i32 = arith.constant 0 : i32
    %c0_i32_0 = arith.constant 0 : i32
    %c0_i32_1 = arith.constant 0 : i32
    return %c0_i32, %c0_i32_0 : i32, i32
  }
  func.func @transform_4(%arg0: i32) -> (i32, i32) {
    %c0_i32 = arith.constant 0 : i32
    %c0_i32_0 = arith.constant 0 : i32
    %c0_i32_1 = arith.constant 0 : i32
    return %c0_i32, %c0_i32_0 : i32, i32
  }
  func.func @transform_5(%arg0: i32) -> (i32, i32) {
    %c0_i32 = arith.constant 0 : i32
    %c0_i32_0 = arith.constant 0 : i32
    %c0_i32_1 = arith.constant 0 : i32
    return %c0_i32, %c0_i32_0 : i32, i32
  }
  func.func @transform_6(%arg0: i32) -> (i32, i32) {
    %c0_i32 = arith.constant 0 : i32
    %c0_i32_0 = arith.constant 0 : i32
    %c0_i32_1 = arith.constant 0 : i32
    return %c0_i32, %c0_i32_0 : i32, i32
  }
  func.func @transform_7(%arg0: i32) -> (i32, i32) {
    %c0_i32 = arith.constant 0 : i32
    %c0_i32_0 = arith.constant 0 : i32
    %c0_i32_1 = arith.constant 0 : i32
    return %c0_i32, %c0_i32_0 : i32, i32
  }
  func.func @transform_8(%arg0: i32) -> (i32, i32) {
    %c0_i32 = arith.constant 0 : i32
    %c0_i32_0 = arith.constant 0 : i32
    %c0_i32_1 = arith.constant 0 : i32
    return %c0_i32, %c0_i32_0 : i32, i32
  }
  func.func @transform_9(%arg0: i32) -> (i32, i32) {
    %c0_i32 = arith.constant 0 : i32
    %c0_i32_0 = arith.constant 0 : i32
    %c0_i32_1 = arith.constant 0 : i32
    return %c0_i32, %c0_i32_0 : i32, i32
  }
  func.func @transform_10(%arg0: i32) -> (i32, i32) {
    %c0_i32 = arith.constant 0 : i32
    %c0_i32_0 = arith.constant 0 : i32
    %c0_i32_1 = arith.constant 0 : i32
    return %c0_i32, %c0_i32_0 : i32, i32
  }
  func.func @transform_11(%arg0: i32) -> (i32, i32, i32, i32) {
    %c0_i32 = arith.constant 0 : i32
    %c0_i32_0 = arith.constant 0 : i32
    %c0_i32_1 = arith.constant 0 : i32
    %c0_i32_2 = arith.constant 0 : i32
    return %arg0, %c0_i32, %c0_i32_0, %c0_i32_1 : i32, i32, i32, i32
  }
}

</mosaic_0001>

<llo_original>
// kernel: lmodule_forward.1
$region0: #{lmodule_forward.1}
  #allocation0 [shape = 'u32[]', space=smem, size = 0x4, offset = 0x4, fixed_abs, tag = 'smem constant byte address 0x4 - core index']
  #allocation1 [shape = 'u32[144,128]{1,0:T(1,128)}', space=vmem, size = 0x12000, scoped, tag = 'internal scratch']
  #allocation2 [shape = 'f32[16,512]{1,0:T(8,128)}', space=vmem, size = 0x8000, scoped, tag = 'scratch operand']
  %s0 = inlined_call_operand.vmem [shape: f32[4,2,8,256], index: 0, kind: input, shape index: {}, may-alias: {0,1}]
  %s1 = inlined_call_operand.vmem [shape: f32[4,2,8,256], index: 1, kind: input, shape index: {}, may-alias: {0,1}]
  %s2 = inlined_call_operand.vmem [shape: f32[8,1], index: 2, kind: input, shape index: {}]
  %s3 = inlined_call_operand.vmem [shape: f32[1,256], index: 3, kind: input, shape index: {}]
  %s4 = inlined_call_operand.vmem [shape: f32[1,256], index: 4, kind: input, shape index: {}]
  %s5 = inlined_call_operand.vmem [shape: f32[16,8], index: 5, kind: input, shape index: {}]
  %s6 = inlined_call_operand.vmem [shape: f32[16,1], index: 6, kind: input, shape index: {}]
  %s7 = inlined_call_operand.vmem [shape: f32[16,144], index: 7, kind: input, shape index: {}]
  %s8 = inlined_call_operand.vmem [shape: f32[16,1], index: 8, kind: input, shape index: {}]
  %s9 = inlined_call_operand.vmem [shape: f32[8,16], index: 9, kind: input, shape index: {}]
  %s10 = inlined_call_operand.vmem [shape: f32[8,1], index: 10, kind: input, shape index: {}]
  %s11 = inlined_call_operand.vmem [shape: f32[4,2,8,256], index: 11, kind: output, shape index: {}]
  %s12 = sld [smem:[#allocation0]]
  $region77: #{lmodule_forward.1} parent=0
    _
  %s14 = ssub.s32 1, %s12
  %s15 = scalar_select 0, %s14, %s12
  loop: start=0, step=1, limit=6
  $region2: #{lmodule_forward.1} parent=0 // loop_pre_header
    _
  $region3: #{lmodule_forward.1} parent=0 // loop_header
    %s17 = sphi 0, %s21
    %p18 = scmp.ge.s32.totalorder %s17, 6
    %s27 = sphi 0, %s29
    %s30 = sphi 0, %s27
    %s31 = sphi 0, %s30
    %s47 = sphi 0, %s31
    %s59 = sphi 0, %s61
    %s62 = sphi 0, %s59
    %s63 = sphi 0, %s62
    %s79 = sphi 0, %s63
    %s83 = sphi 0, %s83
    %s85 = sphi 0, %s83
    %s86 = sphi 0, %s85
    %s100 = sphi 0, %s86
    %s104 = sphi 0, %s104
    %s106 = sphi 0, %s104
    %s107 = sphi 0, %s106
    %s121 = sphi 0, %s107
    %s125 = sphi 0, %s125
    %s127 = sphi 0, %s125
    %s128 = sphi 0, %s127
    %s142 = sphi 0, %s128
    %s146 = sphi 0, %s146
    %s148 = sphi 0, %s146
    %s149 = sphi 0, %s148
    %s163 = sphi 0, %s149
    %s167 = sphi 0, %s167
    %s169 = sphi 0, %s167
    %s170 = sphi 0, %s169
    %s184 = sphi 0, %s170
    %s188 = sphi 0, %s188
    %s190 = sphi 0, %s188
    %s191 = sphi 0, %s190
    %s205 = sphi 0, %s191
    %s209 = sphi 0, %s209
    %s211 = sphi 0, %s209
    %s212 = sphi 0, %s211
    %s226 = sphi 0, %s212
    %s230 = sphi 0, %s230
    %s232 = sphi 0, %s230
    %s233 = sphi 0, %s232
    %s247 = sphi 0, %s233
    %s251 = sphi 0, %s251
    %s253 = sphi 0, %s251
    %s254 = sphi 0, %s253
    %s268 = sphi 0, %s254
    %s274 = sphi 0, %s276
    %s277 = sphi 0, %s274
    %s278 = sphi 0, %s277
    %s294 = sphi 0, %s278
  $region4: #{lmodule_forward.1} parent=0 // loop_header_branch
    %20 = sbr.rel (%p18) target = $region8
  $region5: #{lmodule_forward.1} parent=0 // loop_body
    %s22 = ssub.s32 %s17, 1
    %s23 = ssub.s32 %s17, 2
    %s24 = sadd.s32 %s17, 1
    %s25 = ssub.s32 %s17, %s24
    %p26 = scmp.eq.s32.totalorder %s25, 0
    %s28 = sadd.s32 %s27, 1
    %s29 = scalar_select %p26, %s27, %s28
    %p32 = pneg %p26
    %p33 = scmp.eq.s32.totalorder %s17, 3
    %p34 = por %p32, %p33
    %p35 = scmp.ne.s32.totalorder %s27, %s30
    %p36 = scmp.eq.s32.totalorder %s17, 0
    %p37 = por %p35, %p36
    %p38 = scmp.ne.s32.totalorder %s27, %s30
    %p39 = scmp.eq.s32.totalorder %s22, 3
    %p40 = por %p38, %p39
    %p41 = scmp.ne.s32.totalorder %s30, %s31
    %p42 = scmp.eq.s32.totalorder %s22, 0
    %p43 = por %p41, %p42
    %p44 = scmp.ne.s32.totalorder %s30, %s31
    %p45 = scmp.eq.s32.totalorder %s23, 3
    %p46 = por %p44, %p45
    %p48 = scmp.ne.s32.totalorder %s31, %s47
    %p49 = scmp.eq.s32.totalorder %s23, 0
    %p50 = por %p48, %p49
    %s51 = sadd.s32 %s17, 1
    %p52 = scmp.lt.s32.totalorder %s51, 3
    %s53 = scalar_select %p52, %s51, 3
    %s54 = sadd.s32 %s24, 1
    %p55 = scmp.lt.s32.totalorder %s54, 3
    %s56 = scalar_select %p55, %s54, 3
    %s57 = ssub.s32 %s53, %s56
    %p58 = scmp.eq.s32.totalorder %s57, 0
    %s60 = sadd.s32 %s59, 1
    %s61 = scalar_select %p58, %s59, %s60
    %p64 = pneg %p58
    %p65 = scmp.eq.s32.totalorder %s17, 3
    %p66 = por %p64, %p65
    %p67 = scmp.ne.s32.totalorder %s59, %s62
    %p68 = scmp.eq.s32.totalorder %s17, 0
    %p69 = por %p67, %p68
    %p70 = scmp.ne.s32.totalorder %s59, %s62
    %p71 = scmp.eq.s32.totalorder %s22, 3
    %p72 = por %p70, %p71
    %p73 = scmp.ne.s32.totalorder %s62, %s63
    %p74 = scmp.eq.s32.totalorder %s22, 0
    %p75 = por %p73, %p74
    %p76 = scmp.ne.s32.totalorder %s62, %s63
    %p77 = scmp.eq.s32.totalorder %s23, 3
    %p78 = por %p76, %p77
    %p80 = scmp.ne.s32.totalorder %s63, %s79
    %p81 = scmp.eq.s32.totalorder %s23, 0
    %p82 = por %p80, %p81
    %s84 = sadd.s32 %s83, 1
    %p87 = scmp.eq.s32.totalorder %s17, 3
    %p88 = scmp.ne.s32.totalorder %s83, %s85
    %p89 = scmp.eq.s32.totalorder %s17, 0
    %p90 = por %p88, %p89
    %p91 = scmp.ne.s32.totalorder %s83, %s85
    %p92 = scmp.eq.s32.totalorder %s22, 3
    %p93 = por %p91, %p92
    %p94 = scmp.ne.s32.totalorder %s85, %s86
    %p95 = scmp.eq.s32.totalorder %s22, 0
    %p96 = por %p94, %p95
    %p97 = scmp.ne.s32.totalorder %s85, %s86
    %p98 = scmp.eq.s32.totalorder %s23, 3
    %p99 = por %p97, %p98
    %p101 = scmp.ne.s32.totalorder %s86, %s100
    %p102 = scmp.eq.s32.totalorder %s23, 0
    %p103 = por %p101, %p102
    %s105 = sadd.s32 %s104, 1
    %p108 = scmp.eq.s32.totalorder %s17, 3
    %p109 = scmp.ne.s32.totalorder %s104, %s106
    %p110 = scmp.eq.s32.totalorder %s17, 0
    %p111 = por %p109, %p110
    %p112 = scmp.ne.s32.totalorder %s104, %s106
    %p113 = scmp.eq.s32.totalorder %s22, 3
    %p114 = por %p112, %p113
    %p115 = scmp.ne.s32.totalorder %s106, %s107
    %p116 = scmp.eq.s32.totalorder %s22, 0
    %p117 = por %p115, %p116
    %p118 = scmp.ne.s32.totalorder %s106, %s107
    %p119 = scmp.eq.s32.totalorder %s23, 3
    %p120 = por %p118, %p119
    %p122 = scmp.ne.s32.totalorder %s107, %s121
    %p123 = scmp.eq.s32.totalorder %s23, 0
    %p124 = por %p122, %p123
    %s126 = sadd.s32 %s125, 1
    %p129 = scmp.eq.s32.totalorder %s17, 3
    %p130 = scmp.ne.s32.totalorder %s125, %s127
    %p131 = scmp.eq.s32.totalorder %s17, 0
    %p132 = por %p130, %p131
    %p133 = scmp.ne.s32.totalorder %s125, %s127
    %p134 = scmp.eq.s32.totalorder %s22, 3
    %p135 = por %p133, %p134
    %p136 = scmp.ne.s32.totalorder %s127, %s128
    %p137 = scmp.eq.s32.totalorder %s22, 0
    %p138 = por %p136, %p137
    %p139 = scmp.ne.s32.totalorder %s127, %s128
    %p140 = scmp.eq.s32.totalorder %s23, 3
    %p141 = por %p139, %p140
    %p143 = scmp.ne.s32.totalorder %s128, %s142
    %p144 = scmp.eq.s32.totalorder %s23, 0
    %p145 = por %p143, %p144
    %s147 = sadd.s32 %s146, 1
    %p150 = scmp.eq.s32.totalorder %s17, 3
    %p151 = scmp.ne.s32.totalorder %s146, %s148
    %p152 = scmp.eq.s32.totalorder %s17, 0
    %p153 = por %p151, %p152
    %p154 = scmp.ne.s32.totalorder %s146, %s148
    %p155 = scmp.eq.s32.totalorder %s22, 3
    %p156 = por %p154, %p155
    %p157 = scmp.ne.s32.totalorder %s148, %s149
    %p158 = scmp.eq.s32.totalorder %s22, 0
    %p159 = por %p157, %p158
    %p160 = scmp.ne.s32.totalorder %s148, %s149
    %p161 = scmp.eq.s32.totalorder %s23, 3
    %p162 = por %p160, %p161
    %p164 = scmp.ne.s32.totalorder %s149, %s163
    %p165 = scmp.eq.s32.totalorder %s23, 0
    %p166 = por %p164, %p165
    %s168 = sadd.s32 %s167, 1
    %p171 = scmp.eq.s32.totalorder %s17, 3
    %p172 = scmp.ne.s32.totalorder %s167, %s169
    %p173 = scmp.eq.s32.totalorder %s17, 0
    %p174 = por %p172, %p173
    %p175 = scmp.ne.s32.totalorder %s167, %s169
    %p176 = scmp.eq.s32.totalorder %s22, 3
    %p177 = por %p175, %p176
    %p178 = scmp.ne.s32.totalorder %s169, %s170
    %p179 = scmp.eq.s32.totalorder %s22, 0
    %p180 = por %p178, %p179
    %p181 = scmp.ne.s32.totalorder %s169, %s170
    %p182 = scmp.eq.s32.totalorder %s23, 3
    %p183 = por %p181, %p182
    %p185 = scmp.ne.s32.totalorder %s170, %s184
    %p186 = scmp.eq.s32.totalorder %s23, 0
    %p187 = por %p185, %p186
    %s189 = sadd.s32 %s188, 1
    %p192 = scmp.eq.s32.totalorder %s17, 3
    %p193 = scmp.ne.s32.totalorder %s188, %s190
    %p194 = scmp.eq.s32.totalorder %s17, 0
    %p195 = por %p193, %p194
    %p196 = scmp.ne.s32.totalorder %s188, %s190
    %p197 = scmp.eq.s32.totalorder %s22, 3
    %p198 = por %p196, %p197
    %p199 = scmp.ne.s32.totalorder %s190, %s191
    %p200 = scmp.eq.s32.totalorder %s22, 0
    %p201 = por %p199, %p200
    %p202 = scmp.ne.s32.totalorder %s190, %s191
    %p203 = scmp.eq.s32.totalorder %s23, 3
    %p204 = por %p202, %p203
    %p206 = scmp.ne.s32.totalorder %s191, %s205
    %p207 = scmp.eq.s32.totalorder %s23, 0
    %p208 = por %p206, %p207
    %s210 = sadd.s32 %s209, 1
    %p213 = scmp.eq.s32.totalorder %s17, 3
    %p214 = scmp.ne.s32.totalorder %s209, %s211
    %p215 = scmp.eq.s32.totalorder %s17, 0
    %p216 = por %p214, %p215
    %p217 = scmp.ne.s32.totalorder %s209, %s211
    %p218 = scmp.eq.s32.totalorder %s22, 3
    %p219 = por %p217, %p218
    %p220 = scmp.ne.s32.totalorder %s211, %s212
    %p221 = scmp.eq.s32.totalorder %s22, 0
    %p222 = por %p220, %p221
    %p223 = scmp.ne.s32.totalorder %s211, %s212
    %p224 = scmp.eq.s32.totalorder %s23, 3
    %p225 = por %p223, %p224
    %p227 = scmp.ne.s32.totalorder %s212, %s226
    %p228 = scmp.eq.s32.totalorder %s23, 0
    %p229 = por %p227, %p228
    %s231 = sadd.s32 %s230, 1
    %p234 = scmp.eq.s32.totalorder %s17, 3
    %p235 = scmp.ne.s32.totalorder %s230, %s232
    %p236 = scmp.eq.s32.totalorder %s17, 0
    %p237 = por %p235, %p236
    %p238 = scmp.ne.s32.totalorder %s230, %s232
    %p239 = scmp.eq.s32.totalorder %s22, 3
    %p240 = por %p238, %p239
    %p241 = scmp.ne.s32.totalorder %s232, %s233
    %p242 = scmp.eq.s32.totalorder %s22, 0
    %p243 = por %p241, %p242
    %p244 = scmp.ne.s32.totalorder %s232, %s233
    %p245 = scmp.eq.s32.totalorder %s23, 3
    %p246 = por %p244, %p245
    %p248 = scmp.ne.s32.totalorder %s233, %s247
    %p249 = scmp.eq.s32.totalorder %s23, 0
    %p250 = por %p248, %p249
    %s252 = sadd.s32 %s251, 1
    %p255 = scmp.eq.s32.totalorder %s17, 3
    %p256 = scmp.ne.s32.totalorder %s251, %s253
    %p257 = scmp.eq.s32.totalorder %s17, 0
    %p258 = por %p256, %p257
    %p259 = scmp.ne.s32.totalorder %s251, %s253
    %p260 = scmp.eq.s32.totalorder %s22, 3
    %p261 = por %p259, %p260
    %p262 = scmp.ne.s32.totalorder %s253, %s254
    %p263 = scmp.eq.s32.totalorder %s22, 0
    %p264 = por %p262, %p263
    %p265 = scmp.ne.s32.totalorder %s253, %s254
    %p266 = scmp.eq.s32.totalorder %s23, 3
    %p267 = por %p265, %p266
    %p269 = scmp.ne.s32.totalorder %s254, %s268
    %p270 = scmp.eq.s32.totalorder %s23, 0
    %p271 = por %p269, %p270
    %s272 = ssub.s32 %s17, %s24
    %p273 = scmp.eq.s32.totalorder %s272, 0
    %s275 = sadd.s32 %s274, 1
    %s276 = scalar_select %p273, %s274, %s275
    %p279 = pneg %p273
    %p280 = scmp.eq.s32.totalorder %s17, 3
    %p281 = por %p279, %p280
    %p282 = scmp.ne.s32.totalorder %s274, %s277
    %p283 = scmp.eq.s32.totalorder %s17, 0
    %p284 = por %p282, %p283
    %p285 = scmp.ne.s32.totalorder %s274, %s277
    %p286 = scmp.eq.s32.totalorder %s22, 3
    %p287 = por %p285, %p286
    %p288 = scmp.ne.s32.totalorder %s277, %s278
    %p289 = scmp.eq.s32.totalorder %s22, 0
    %p290 = por %p288, %p289
    %p291 = scmp.ne.s32.totalorder %s277, %s278
    %p292 = scmp.eq.s32.totalorder %s23, 3
    %p293 = por %p291, %p292
    %p295 = scmp.ne.s32.totalorder %s278, %s294
    %p296 = scmp.eq.s32.totalorder %s23, 0
    %p297 = por %p295, %p296
    %p298 = scmp.le.s32.totalorder 1, %s17
    %p299 = scmp.lt.s32.totalorder %s17, 5
    %p300 = pnand %p298, %p299
    %p301 = pneg %p300
    // Predicated region
    $region9: #{lmodule_forward.1} parent=5 // pred_check
      _
    $region10: #{lmodule_forward.1} parent=5 // pred_check_branch
      %303 = sbr.rel (%p300) target = $region12
    $region11: #{lmodule_forward.1} parent=5 // pred_region
      %s304 = ssub.s32 %s17, 1
      // Predicated region
      $region13: #{lmodule_forward.1} parent=11 // pred_check
        %p305 = pneg %p96
      $region14: #{lmodule_forward.1} parent=11 // pred_check_branch
        %307 = sbr.rel (%p305) target = $region16
      $region15: #{lmodule_forward.1} parent=11 // pred_region
        _
      $region16: #{lmodule_forward.1} parent=11 // pred_fallthru
        _
      // Predicated region
      $region17: #{lmodule_forward.1} parent=11 // pred_check
        %p308 = pneg %p117
      $region18: #{lmodule_forward.1} parent=11 // pred_check_branch
        %310 = sbr.rel (%p308) target = $region20
      $region19: #{lmodule_forward.1} parent=11 // pred_region
        _
      $region20: #{lmodule_forward.1} parent=11 // pred_fallthru
        _
      // Predicated region
      $region21: #{lmodule_forward.1} parent=11 // pred_check
        %p311 = pneg %p138
      $region22: #{lmodule_forward.1} parent=11 // pred_check_branch
        %313 = sbr.rel (%p311) target = $region24
      $region23: #{lmodule_forward.1} parent=11 // pred_region
        _
      $region24: #{lmodule_forward.1} parent=11 // pred_fallthru
        _
      // Predicated region
      $region25: #{lmodule_forward.1} parent=11 // pred_check
        %p314 = pneg %p159
      $region26: #{lmodule_forward.1} parent=11 // pred_check_branch
        %316 = sbr.rel (%p314) target = $region28
      $region27: #{lmodule_forward.1} parent=11 // pred_region
        _
      $region28: #{lmodule_forward.1} parent=11 // pred_fallthru
        _
      // Predicated region
      $region29: #{lmodule_forward.1} parent=11 // pred_check
        %p317 = pneg %p180
      $region30: #{lmodule_forward.1} parent=11 // pred_check_branch
        %319 = sbr.rel (%p317) target = $region32
      $region31: #{lmodule_forward.1} parent=11 // pred_region
        _
      $region32: #{lmodule_forward.1} parent=11 // pred_fallthru
        _
      // Predicated region
      $region33: #{lmodule_forward.1} parent=11 // pred_check
        %p320 = pneg %p201
      $region34: #{lmodule_forward.1} parent=11 // pred_check_branch
        %322 = sbr.rel (%p320) target = $region36
      $region35: #{lmodule_forward.1} parent=11 // pred_region
        _
      $region36: #{lmodule_forward.1} parent=11 // pred_fallthru
        _
      // Predicated region
      $region37: #{lmodule_forward.1} parent=11 // pred_check
        %p323 = pneg %p222
      $region38: #{lmodule_forward.1} parent=11 // pred_check_branch
        %325 = sbr.rel (%p323) target = $region40
      $region39: #{lmodule_forward.1} parent=11 // pred_region
        _
      $region40: #{lmodule_forward.1} parent=11 // pred_fallthru
        _
      // Predicated region
      $region41: #{lmodule_forward.1} parent=11 // pred_check
        %p326 = pneg %p243
      $region42: #{lmodule_forward.1} parent=11 // pred_check_branch
        %328 = sbr.rel (%p326) target = $region44
      $region43: #{lmodule_forward.1} parent=11 // pred_region
        _
      $region44: #{lmodule_forward.1} parent=11 // pred_fallthru
        _
      // Predicated region
      $region45: #{lmodule_forward.1} parent=11 // pred_check
        %p329 = pneg %p264
      $region46: #{lmodule_forward.1} parent=11 // pred_check_branch
        %331 = sbr.rel (%p329) target = $region48
      $region47: #{lmodule_forward.1} parent=11 // pred_region
        _
      $region48: #{lmodule_forward.1} parent=11 // pred_fallthru
        _
    $region12: #{lmodule_forward.1} parent=5 // pred_fallthru
      _
    %p332 = scmp.lt.s32.totalorder %s17, 4
    // Predicated region
    $region49: #{lmodule_forward.1} parent=5 // pred_check
      %p333 = pneg %p332
    $region50: #{lmodule_forward.1} parent=5 // pred_check_branch
      %335 = sbr.rel (%p333) target = $region52
    $region51: #{lmodule_forward.1} parent=5 // pred_region
      // Predicated region
      $region53: #{lmodule_forward.1} parent=51 // pred_check
        %p336 = pneg %p37
      $region54: #{lmodule_forward.1} parent=51 // pred_check_branch
        %338 = sbr.rel (%p336) target = $region56
      $region55: #{lmodule_forward.1} parent=51 // pred_region
        %p339 = scmp.lt.s32.totalorder %s17, 3
        %s340 = scalar_select %p339, %s17, 3
        %s341 = smul.addr %s340, 4
        %s342 = smul.addr %s341, 8
        %s343 = scalar_lea.vmem %s0, %s342
      $region56: #{lmodule_forward.1} parent=51 // pred_fallthru
        _
      // Predicated region
      $region57: #{lmodule_forward.1} parent=51 // pred_check
        %p344 = pneg %p69
      $region58: #{lmodule_forward.1} parent=51 // pred_check_branch
        %346 = sbr.rel (%p344) target = $region60
      $region59: #{lmodule_forward.1} parent=51 // pred_region
        %s347 = sadd.s32 %s17, 1
        %p348 = scmp.lt.s32.totalorder %s347, 3
        %s349 = scalar_select %p348, %s347, 3
        %p350 = scmp.lt.s32.totalorder %s349, 3
        %s351 = scalar_select %p350, %s349, 3
        %s352 = smul.addr %s351, 4
        %s353 = smul.addr %s352, 8
        %s354 = scalar_lea.vmem %s1, %s353
        %s355 = sadd.s32 %s17, 1
        %p356 = scmp.lt.s32.totalorder %s355, 3
        %s357 = scalar_select %p356, %s355, 3
      $region60: #{lmodule_forward.1} parent=51 // pred_fallthru
        _
    $region52: #{lmodule_forward.1} parent=5 // pred_fallthru
      _
    %p358 = scmp.le.s32.totalorder 1, %s17
    %p359 = scmp.lt.s32.totalorder %s17, 5
    %p360 = pnand %p358, %p359
    %p361 = pneg %p360
    // Predicated region
    $region61: #{lmodule_forward.1} parent=5 // pred_check
      _
    $region62: #{lmodule_forward.1} parent=5 // pred_check_branch
      %363 = sbr.rel (%p360) target = $region64
    $region63: #{lmodule_forward.1} parent=5 // pred_region
      %s364 = ssub.s32 %s17, 1
      %p365 = scmp.lt.s32.totalorder %s22, 3
      %s366 = scalar_select %p365, %s22, 3
      %s367 = smul.addr %s366, 4
      %s368 = smul.addr %s367, 8
      %s369 = scalar_lea.vmem %s0, %s368
      %p370 = pneg %p43
      %p371 = pneg %p40
      %s372 = sadd.s32 %s22, 1
      %p373 = scmp.lt.s32.totalorder %s372, 3
      %s374 = scalar_select %p373, %s372, 3
      %p375 = scmp.lt.s32.totalorder %s374, 3
      %s376 = scalar_select %p375, %s374, 3
      %s377 = smul.addr %s376, 4
      %s378 = smul.addr %s377, 8
      %s379 = scalar_lea.vmem %s1, %s378
      %p380 = pneg %p75
      %p381 = pneg %p72
      %p382 = pneg %p96
      %p383 = pneg %p93
      %p384 = pneg %p117
      %p385 = pneg %p114
      %p386 = pneg %p138
      %p387 = pneg %p135
      %p388 = pneg %p159
      %p389 = pneg %p156
      %p390 = pneg %p180
      %p391 = pneg %p177
      %p392 = pneg %p201
      %p393 = pneg %p198
      %p394 = pneg %p222
      %p395 = pneg %p219
      %p396 = pneg %p243
      %p397 = pneg %p240
      %p398 = pneg %p264
      %p399 = pneg %p261
      %p400 = pneg %p290
      %p401 = pneg %p287
      %p402 = scmp.lt.s32.totalorder %s22, 3
      %s403 = scalar_select %p402, %s22, 3
      %s404 = smul.addr %s403, 4
      %s405 = smul.addr %s404, 8
      %s406 = scalar_lea.vmem %s11, %s405
      %p407 = scmp.lt.s32.totalorder %s22, 3
      %s408 = scalar_select %p407, %s22, 3
      %s409 = smul.addr %s408, 4
      %s410 = smul.addr %s409, 8
      %s411 = scalar_lea.vmem %s0, %s410
      %s412 = sadd.s32 %s22, 1
      %p413 = scmp.lt.s32.totalorder %s412, 3
      %s414 = scalar_select %p413, %s412, 3
      %p415 = scmp.lt.s32.totalorder %s414, 3
      %s416 = scalar_select %p415, %s414, 3
      %s417 = smul.addr %s416, 4
      %s418 = smul.addr %s417, 8
      %s419 = scalar_lea.vmem %s1, %s418
      %s420 = sadd.s32 %s22, 1
      %p421 = scmp.lt.s32.totalorder %s420, 3
      %s422 = scalar_select %p421, %s420, 3
      %p423 = scmp.lt.s32.totalorder %s22, 3
      %s424 = scalar_select %p423, %s22, 3
      %s425 = smul.addr %s424, 4
      %s426 = smul.addr %s425, 8
      %s427 = scalar_lea.vmem %s11, %s426
      %s428 = sadd.s32 %s22, 1
      %p429 = scmp.lt.s32.totalorder %s428, 4
      %s430 = scalar_select %p429, 1, 0
      %s431 = scvt.s32.f32 %s430
      %v432 = vld [vmem:[%s2] sm:$0xff]
      %v433 = vld [vmem:[%s3] sm:$0x3]
      %v434 = vld [vmem:[%s4] sm:$0x3]
      %v435 = vld [vmem:[%s5] sm:$0xff]
      %v436 = vld [vmem:[%s5 + $0x8] sm:$0xff]
      %v437 = vld [vmem:[%s6] sm:$0xff]
      %v438 = vld [vmem:[%s6 + $0x8] sm:$0xff]
      %v439 = vld [vmem:[%s7] sm:$0xff]
      %v440 = vld [vmem:[%s7 + $0x8] sm:$0xff]
      %v441 = vld [vmem:[%s7 + $0x10] sm:$0xff]
      %v442 = vld [vmem:[%s7 + $0x18] sm:$0xff]
      %v443 = vld [vmem:[%s8] sm:$0xff]
      %v444 = vld [vmem:[%s8 + $0x8] sm:$0xff]
      %v445 = vld [vmem:[%s9] sm:$0xff]
      %v446 = vld [vmem:[%s10] sm:$0xff]
      %447 = vst [vmem:[#allocation2] sm:$0xff] 0.0
      %448 = vst [vmem:[#allocation2 + $0x20] sm:$0xff] 0.0
      %449 = vst [vmem:[#allocation2 + $0x18] sm:$0xff] 0.0
      %450 = vst [vmem:[#allocation2 + $0x38] sm:$0xff] 0.0
      %v451 = vstv %s431
      %v452 = vmul.f32 %v432, %v451
      %v453 = vsub.f32 1.0, %v432
      %v454 = vld [vmem:[%s411] sm:$0xff]
      %v455 = vld [vmem:[%s411 + $0x8] sm:$0xff]
      %v456 = vld [vmem:[%s419] sm:$0xff]
      %v457 = vld [vmem:[%s419 + $0x8] sm:$0xff]
      %459 = vset.pattern.permute.xlu0 0
      %460 = vperm.xlu0 %459, %v452
      %v461 = vpop.permute.xlu0 %460
      %v463 = vmul.f32 %v456, %v461
      %v464 = vmul.f32 %v457, %v461
      %466 = vset.pattern.permute.xlu0 0
      %467 = vperm.xlu0 %466, %v453
      %v468 = vpop.permute.xlu0 %467
      %v470 = vmul.f32 %v454, %v468
      %v471 = vmul.f32 %v455, %v468
      %v472 = vadd.f32 %v463, %v470
      %v473 = vadd.f32 %v464, %v471
      %475 = vset.pattern.permute.xlu0 0
      %476 = vperm.xlu0 %475, %v437
      %v477 = vpop.permute.xlu0 %476
      %480 = vset.pattern.permute.xlu0 0
      %481 = vperm.xlu0 %480, %v438
      %v482 = vpop.permute.xlu0 %481
      %vm484 = vcmask 64512
      %v486 = vsel %vm484, %v435, 0
      %v489 = vsel %vm484, %v436, 0
      %491 = vmatprep.subr.mxu0 %v473
      %492 = vmatpush1.msra.mxu0 %v472
      %493 = vmatprep.subr.mxu0 0.0
      %494 = vmatpush1.msra.mxu0 0.0
      %495 = vmatprep.subr.mxu0 0.0
      %496 = vmatpush1.msra.mxu0 0.0
      %497 = vmatprep.subr.mxu0 0.0
      %498 = vmatpush1.msra.mxu0 0.0
      %499 = vmatprep.subr.mxu0 0.0
      %500 = vmatpush1.msra.mxu0 0.0
      %501 = vmatprep.subr.mxu0 0.0
      %502 = vmatpush1.msra.mxu0 0.0
      %503 = vmatprep.subr.mxu0 0.0
      %504 = vmatpush1.msra.mxu0 0.0
      %505 = vmatprep.subr.mxu0 0.0
      %506 = vmatpush1.msra.mxu0 0.0
      %507 = vmatprep.subr.mxu0 0.0
      %508 = vmatpush1.msra.mxu0 0.0
      %509 = vmatprep.subr.mxu0 0.0
      %510 = vmatpush1.msra.mxu0 0.0
      %511 = vmatprep.subr.mxu0 0.0
      %512 = vmatpush1.msra.mxu0 0.0
      %513 = vmatprep.subr.mxu0 0.0
      %514 = vmatpush1.msra.mxu0 0.0
      %515 = vmatprep.subr.mxu0 0.0
      %516 = vmatpush1.msra.mxu0 0.0
      %517 = vmatprep.subr.mxu0 0.0
      %518 = vmatpush1.msra.mxu0 0.0
      %519 = vmatprep.subr.mxu0 0.0
      %520 = vmatpush1.msra.mxu0 0.0
      %521 = vmatprep.subr.mxu0 0.0
      %522 = vmatpush1.msra.mxu0 0.0
      %523 = vmatprep.subr.mxu0 0.0
      %524 = vmatpush1.msra.mxu0 0.0
      %525 = vmatprep.subr.mxu0 0.0
      %526 = vmatpush1.msra.mxu0 0.0
      %527 = vmatprep.subr.mxu0 0.0
      %528 = vmatpush1.msra.mxu0 0.0
      %529 = vmatprep.subr.mxu0 0.0
      %530 = vmatpush1.msra.mxu0 0.0
      %531 = vmatprep.subr.mxu0 0.0
      %532 = vmatpush1.msra.mxu0 0.0
      %533 = vmatprep.subr.mxu0 0.0
      %534 = vmatpush1.msra.mxu0 0.0
      %535 = vmatprep.subr.mxu0 0.0
      %536 = vmatpush1.msra.mxu0 0.0
      %537 = vmatprep.subr.mxu0 0.0
      %538 = vmatpush1.msra.mxu0 0.0
      %539 = vmatprep.subr.mxu0 0.0
      %540 = vmatpush1.msra.mxu0 0.0
      %541 = vmatprep.subr.mxu0 0.0
      %542 = vmatpush1.msra.mxu0 0.0
      %543 = vmatprep.subr.mxu0 0.0
      %544 = vmatpush1.msra.mxu0 0.0
      %545 = vmatprep.subr.mxu0 0.0
      %546 = vmatpush1.msra.mxu0 0.0
      %547 = vmatprep.subr.mxu0 0.0
      %548 = vmatpush1.msra.mxu0 0.0
      %549 = vmatprep.subr.mxu0 0.0
      %550 = vmatpush1.msra.mxu0 0.0
      %551 = vmatprep.subr.mxu0 0.0
      %552 = vmatpush1.msra.mxu0 0.0
      %553 = vmatprep.subr.mxu0 0.0
      %554 = vmatpush1.msra.mxu0 0.0
      %555 = vmatprep.mubr.f32.mxu0 0.0
      %556 = vmatmul.mubr.f32.gmra.mrb[0].mxu0 %v486
      %v557 = vpop.f32.mrb[0].mxu0
      %v558 = vadd.f32 %v477, %v557
      %v559 = vpop.f32.mrb[0].mxu0
      %v560 = vadd.f32 %v477, %v559
      %561 = vmatprep.mubr.f32.mxu0 0.0
      %562 = vmatmul.mubr.f32.gmra.mrb[0].mxu0 %v489
      %v563 = vpop.f32.mrb[0].mxu0
      %v564 = vadd.f32 %v482, %v563
      %v565 = vpop.f32.mrb[0].mxu0
      %v566 = vadd.f32 %v482, %v565
      %567 = vdwg.mxu0
      %568 = vst [vmem:[#allocation2 + $0x8] sm:$0xff] %v558
      %569 = vst [vmem:[#allocation2 + $0x10] sm:$0xff] %v560
      %570 = vst [vmem:[#allocation2 + $0x28] sm:$0xff] %v564
      %571 = vst [vmem:[#allocation2 + $0x30] sm:$0xff] %v566
      %v572 = vld [vmem:[#allocation2] sm:$0xff]
      %v573 = vld [vmem:[#allocation2 + $0x8] sm:$0xff]
      %v574 = vld [vmem:[#allocation2 + $0x10] sm:$0xff]
      %v575 = vld [vmem:[#allocation2 + $0x20] sm:$0xff]
      %v576 = vld [vmem:[#allocation2 + $0x28] sm:$0xff]
      %v577 = vld [vmem:[#allocation2 + $0x30] sm:$0xff]
      %v579 = vlaneseq
      %v580 = vshrl.u32 %v579, 7
      %v581 = vsub.s32 0, %v580
      %v582 = vrot.slane %v433, %v581
      %v583 = vlaneseq
      %v584 = vshrl.u32 %v583, 7
      %v585 = vsub.s32 1, %v584
      %v586 = vrot.slane %v433, %v585
      %587 = vrot.lane.b32.xlu0 %v582, 111
      %v588 = vpop.permute.xlu0 %587
      %589 = vrot.lane.b32.xlu0 %v586, 111
      %v590 = vpop.permute.xlu0 %589
      %vm591 = vcmask 908288
      %v592 = vsel %vm591, %v588, %v590
      %v596 = vmul.f32 %v572, %v588
      %v597 = vmul.f32 %v573, %v592
      %v598 = vmul.f32 %v574, %v590
      %v599 = vmul.f32 %v575, %v588
      %v600 = vmul.f32 %v576, %v592
      %v601 = vmul.f32 %v577, %v590
      %v603 = vlaneseq
      %v604 = vshrl.u32 %v603, 7
      %v605 = vsub.s32 0, %v604
      %v606 = vrot.slane %v434, %v605
      %v607 = vlaneseq
      %v608 = vshrl.u32 %v607, 7
      %v609 = vsub.s32 1, %v608
      %v610 = vrot.slane %v434, %v609
      %611 = vrot.lane.b32.xlu0 %v606, 113
      %v612 = vpop.permute.xlu0 %611
      %613 = vrot.lane.b32.xlu0 %v610, 113
      %v614 = vpop.permute.xlu0 %613
      %vm615 = vcmask 924672
      %v616 = vsel %vm615, %v612, %v614
      %v620 = vmul.f32 %v572, %v612
      %v621 = vmul.f32 %v573, %v616
      %v622 = vmul.f32 %v574, %v614
      %v623 = vmul.f32 %v575, %v612
      %v624 = vmul.f32 %v576, %v616
      %v625 = vmul.f32 %v577, %v614
      %626 = vrot.lane.b32.xlu0 %v582, 127
      %v627 = vpop.permute.xlu0 %626
      %628 = vrot.lane.b32.xlu0 %v586, 127
      %v629 = vpop.permute.xlu0 %628
      %vm630 = vcmask 1039360
      %v631 = vsel %vm630, %v627, %v629
      %v635 = vmul.f32 %v572, %v627
      %v636 = vmul.f32 %v573, %v631
      %v637 = vmul.f32 %v574, %v629
      %v638 = vmul.f32 %v575, %v627
      %v639 = vmul.f32 %v576, %v631
      %v640 = vmul.f32 %v577, %v629
      %v641 = vld [vmem:[#allocation2 + $0x8] sm:$0xff]
      %v642 = vld [vmem:[#allocation2 + $0x10] sm:$0xff]
      %v643 = vld [vmem:[#allocation2 + $0x18] sm:$0xff]
      %v644 = vld [vmem:[#allocation2 + $0x28] sm:$0xff]
      %v645 = vld [vmem:[#allocation2 + $0x30] sm:$0xff]
      %v646 = vld [vmem:[#allocation2 + $0x38] sm:$0xff]
      %647 = vrot.lane.b32.xlu0 %v606, 1
      %v648 = vpop.permute.xlu0 %647
      %649 = vrot.lane.b32.xlu0 %v610, 1
      %v650 = vpop.permute.xlu0 %649
      %vm651 = vcmask 7168
      %v652 = vsel %vm651, %v648, %v650
      %v656 = vmul.f32 %v641, %v648
      %v657 = vmul.f32 %v642, %v652
      %v658 = vmul.f32 %v643, %v650
      %v659 = vmul.f32 %v644, %v648
      %v660 = vmul.f32 %v645, %v652
      %v661 = vmul.f32 %v646, %v650
      %662 = vrot.lane.b32.xlu0 %v582, 15
      %v663 = vpop.permute.xlu0 %662
      %664 = vrot.lane.b32.xlu0 %v586, 15
      %v665 = vpop.permute.xlu0 %664
      %vm666 = vcmask 121856
      %v667 = vsel %vm666, %v663, %v665
      %v671 = vmul.f32 %v641, %v663
      %v672 = vmul.f32 %v642, %v667
      %v673 = vmul.f32 %v643, %v665
      %v674 = vmul.f32 %v644, %v663
      %v675 = vmul.f32 %v645, %v667
      %v676 = vmul.f32 %v646, %v665
      %677 = vrot.lane.b32.xlu0 %v606, 17
      %v678 = vpop.permute.xlu0 %677
      %679 = vrot.lane.b32.xlu0 %v610, 17
      %v680 = vpop.permute.xlu0 %679
      %vm681 = vcmask 138240
      %v682 = vsel %vm681, %v678, %v680
      %v686 = vmul.f32 %v641, %v678
      %v687 = vmul.f32 %v642, %v682
      %v688 = vmul.f32 %v643, %v680
      %v689 = vmul.f32 %v644, %v678
      %v690 = vmul.f32 %v645, %v682
      %v691 = vmul.f32 %v646, %v680
      %698 = vrot.lane.b32.xlu0 %v572, 127
      %v699 = vpop.permute.xlu0 %698
      %700 = vrot.lane.b32.xlu0 %v573, 127
      %v701 = vpop.permute.xlu0 %700
      %702 = vrot.lane.b32.xlu0 %v574, 127
      %v703 = vpop.permute.xlu0 %702
      %704 = vrot.lane.b32.xlu0 %v575, 127
      %v705 = vpop.permute.xlu0 %704
      %706 = vrot.lane.b32.xlu0 %v576, 127
      %v707 = vpop.permute.xlu0 %706
      %708 = vrot.lane.b32.xlu0 %v577, 127
      %v709 = vpop.permute.xlu0 %708
      %v710 = vsel %vm630, %v699, %v701
      %v711 = vsel %vm630, %v701, %v703
      %v712 = vsel %vm630, %v705, %v707
      %v713 = vsel %vm630, %v707, %v709
      %720 = vrot.lane.b32.xlu0 %v620, 126
      %v721 = vpop.permute.xlu0 %720
      %722 = vrot.lane.b32.xlu0 %v621, 126
      %v723 = vpop.permute.xlu0 %722
      %724 = vrot.lane.b32.xlu0 %v622, 126
      %v725 = vpop.permute.xlu0 %724
      %726 = vrot.lane.b32.xlu0 %v623, 126
      %v727 = vpop.permute.xlu0 %726
      %728 = vrot.lane.b32.xlu0 %v624, 126
      %v729 = vpop.permute.xlu0 %728
      %730 = vrot.lane.b32.xlu0 %v625, 126
      %v731 = vpop.permute.xlu0 %730
      %vm732 = vcmask 1031168
      %v733 = vsel %vm732, %v721, %v723
      %v734 = vsel %vm732, %v723, %v725
      %v735 = vsel %vm732, %v727, %v729
      %v736 = vsel %vm732, %v729, %v731
      %743 = vrot.lane.b32.xlu0 %v635, 112
      %v744 = vpop.permute.xlu0 %743
      %745 = vrot.lane.b32.xlu0 %v636, 112
      %v746 = vpop.permute.xlu0 %745
      %747 = vrot.lane.b32.xlu0 %v637, 112
      %v748 = vpop.permute.xlu0 %747
      %749 = vrot.lane.b32.xlu0 %v638, 112
      %v750 = vpop.permute.xlu0 %749
      %751 = vrot.lane.b32.xlu0 %v639, 112
      %v752 = vpop.permute.xlu0 %751
      %753 = vrot.lane.b32.xlu0 %v640, 112
      %v754 = vpop.permute.xlu0 %753
      %vm755 = vcmask 916480
      %v756 = vsel %vm755, %v744, %v746
      %v757 = vsel %vm755, %v746, %v748
      %v758 = vsel %vm755, %v750, %v752
      %v759 = vsel %vm755, %v752, %v754
      %760 = vrot.lane.b32.xlu0 %v573, 111
      %v761 = vpop.permute.xlu0 %760
      %762 = vrot.lane.b32.xlu0 %v574, 111
      %v763 = vpop.permute.xlu0 %762
      %764 = vrot.lane.b32.xlu0 %v576, 111
      %v765 = vpop.permute.xlu0 %764
      %766 = vrot.lane.b32.xlu0 %v577, 111
      %v767 = vpop.permute.xlu0 %766
      %v768 = vsel %vm591, %v761, %v763
      %v769 = vsel %vm591, %v765, %v767
      %776 = vrot.lane.b32.xlu0 %v656, 110
      %v777 = vpop.permute.xlu0 %776
      %778 = vrot.lane.b32.xlu0 %v657, 110
      %v779 = vpop.permute.xlu0 %778
      %780 = vrot.lane.b32.xlu0 %v658, 110
      %v781 = vpop.permute.xlu0 %780
      %782 = vrot.lane.b32.xlu0 %v659, 110
      %v783 = vpop.permute.xlu0 %782
      %784 = vrot.lane.b32.xlu0 %v660, 110
      %v785 = vpop.permute.xlu0 %784
      %786 = vrot.lane.b32.xlu0 %v661, 110
      %v787 = vpop.permute.xlu0 %786
      %vm788 = vcmask 900096
      %v789 = vsel %vm788, %v777, %v779
      %v790 = vsel %vm788, %v779, %v781
      %v791 = vsel %vm788, %v783, %v785
      %v792 = vsel %vm788, %v785, %v787
      %799 = vrot.lane.b32.xlu0 %v671, 96
      %v800 = vpop.permute.xlu0 %799
      %801 = vrot.lane.b32.xlu0 %v672, 96
      %v802 = vpop.permute.xlu0 %801
      %803 = vrot.lane.b32.xlu0 %v673, 96
      %v804 = vpop.permute.xlu0 %803
      %805 = vrot.lane.b32.xlu0 %v674, 96
      %v806 = vpop.permute.xlu0 %805
      %807 = vrot.lane.b32.xlu0 %v675, 96
      %v808 = vpop.permute.xlu0 %807
      %809 = vrot.lane.b32.xlu0 %v676, 96
      %v810 = vpop.permute.xlu0 %809
      %vm811 = vcmask 785408
      %v812 = vsel %vm811, %v800, %v802
      %v813 = vsel %vm811, %v802, %v804
      %v814 = vsel %vm811, %v806, %v808
      %v815 = vsel %vm811, %v808, %v810
      %822 = vrot.lane.b32.xlu0 %v641, 95
      %v823 = vpop.permute.xlu0 %822
      %824 = vrot.lane.b32.xlu0 %v642, 95
      %v825 = vpop.permute.xlu0 %824
      %826 = vrot.lane.b32.xlu0 %v643, 95
      %v827 = vpop.permute.xlu0 %826
      %828 = vrot.lane.b32.xlu0 %v644, 95
      %v829 = vpop.permute.xlu0 %828
      %830 = vrot.lane.b32.xlu0 %v645, 95
      %v831 = vpop.permute.xlu0 %830
      %832 = vrot.lane.b32.xlu0 %v646, 95
      %v833 = vpop.permute.xlu0 %832
      %vm834 = vcmask 777216
      %v835 = vsel %vm834, %v823, %v825
      %v836 = vsel %vm834, %v825, %v827
      %v837 = vsel %vm834, %v829, %v831
      %v838 = vsel %vm834, %v831, %v833
      %845 = vrot.lane.b32.xlu0 %v686, 94
      %v846 = vpop.permute.xlu0 %845
      %847 = vrot.lane.b32.xlu0 %v687, 94
      %v848 = vpop.permute.xlu0 %847
      %849 = vrot.lane.b32.xlu0 %v688, 94
      %v850 = vpop.permute.xlu0 %849
      %851 = vrot.lane.b32.xlu0 %v689, 94
      %v852 = vpop.permute.xlu0 %851
      %853 = vrot.lane.b32.xlu0 %v690, 94
      %v854 = vpop.permute.xlu0 %853
      %855 = vrot.lane.b32.xlu0 %v691, 94
      %v856 = vpop.permute.xlu0 %855
      %vm857 = vcmask 769024
      %v858 = vsel %vm857, %v846, %v848
      %v859 = vsel %vm857, %v848, %v850
      %v860 = vsel %vm857, %v852, %v854
      %v861 = vsel %vm857, %v854, %v856
      %863 = vset.pattern.permute.xlu0 0
      %864 = vperm.xlu0 %863, %v443
      %v865 = vpop.permute.xlu0 %864
      %868 = vset.pattern.permute.xlu0 0
      %869 = vperm.xlu0 %868, %v444
      %v870 = vpop.permute.xlu0 %869
      %878 = vrot.lane.b32.xlu0 %v596, 17
      %v879 = vpop.permute.xlu0 %878
      %880 = vrot.lane.b32.xlu0 %v597, 17
      %v881 = vpop.permute.xlu0 %880
      %882 = vrot.lane.b32.xlu0 %v598, 17
      %v883 = vpop.permute.xlu0 %882
      %884 = vrot.lane.b32.xlu0 %v599, 17
      %v885 = vpop.permute.xlu0 %884
      %886 = vrot.lane.b32.xlu0 %v600, 17
      %v887 = vpop.permute.xlu0 %886
      %888 = vrot.lane.b32.xlu0 %v601, 17
      %v889 = vpop.permute.xlu0 %888
      %890 = vrot.lane.b32.xlu0 %v710, 17
      %v891 = vpop.permute.xlu0 %890
      %892 = vrot.lane.b32.xlu0 %v711, 17
      %v893 = vpop.permute.xlu0 %892
      %894 = vrot.lane.b32.xlu0 %v703, 17
      %v895 = vpop.permute.xlu0 %894
      %896 = vrot.lane.b32.xlu0 %v712, 17
      %v897 = vpop.permute.xlu0 %896
      %898 = vrot.lane.b32.xlu0 %v713, 17
      %v899 = vpop.permute.xlu0 %898
      %900 = vrot.lane.b32.xlu0 %v709, 17
      %v901 = vpop.permute.xlu0 %900
      %902 = vrot.lane.b32.xlu0 %v733, 17
      %v903 = vpop.permute.xlu0 %902
      %904 = vrot.lane.b32.xlu0 %v734, 17
      %v905 = vpop.permute.xlu0 %904
      %906 = vrot.lane.b32.xlu0 %v725, 17
      %v907 = vpop.permute.xlu0 %906
      %908 = vrot.lane.b32.xlu0 %v735, 17
      %v909 = vpop.permute.xlu0 %908
      %910 = vrot.lane.b32.xlu0 %v736, 17
      %v911 = vpop.permute.xlu0 %910
      %912 = vrot.lane.b32.xlu0 %v731, 17
      %v913 = vpop.permute.xlu0 %912
      %914 = vrot.lane.b32.xlu0 %v756, 17
      %v915 = vpop.permute.xlu0 %914
      %916 = vrot.lane.b32.xlu0 %v757, 17
      %v917 = vpop.permute.xlu0 %916
      %918 = vrot.lane.b32.xlu0 %v748, 17
      %v919 = vpop.permute.xlu0 %918
      %920 = vrot.lane.b32.xlu0 %v758, 17
      %v921 = vpop.permute.xlu0 %920
      %922 = vrot.lane.b32.xlu0 %v759, 17
      %v923 = vpop.permute.xlu0 %922
      %924 = vrot.lane.b32.xlu0 %v754, 17
      %v925 = vpop.permute.xlu0 %924
      %926 = vrot.lane.b32.xlu0 %v761, 17
      %v927 = vpop.permute.xlu0 %926
      %928 = vrot.lane.b32.xlu0 %v768, 17
      %v929 = vpop.permute.xlu0 %928
      %930 = vrot.lane.b32.xlu0 %v763, 17
      %v931 = vpop.permute.xlu0 %930
      %932 = vrot.lane.b32.xlu0 %v765, 17
      %v933 = vpop.permute.xlu0 %932
      %934 = vrot.lane.b32.xlu0 %v769, 17
      %v935 = vpop.permute.xlu0 %934
      %936 = vrot.lane.b32.xlu0 %v767, 17
      %v937 = vpop.permute.xlu0 %936
      %938 = vrot.lane.b32.xlu0 %v777, 17
      %v939 = vpop.permute.xlu0 %938
      %940 = vrot.lane.b32.xlu0 %v789, 17
      %v941 = vpop.permute.xlu0 %940
      %942 = vrot.lane.b32.xlu0 %v790, 17
      %v943 = vpop.permute.xlu0 %942
      %944 = vrot.lane.b32.xlu0 %v783, 17
      %v945 = vpop.permute.xlu0 %944
      %946 = vrot.lane.b32.xlu0 %v791, 17
      %v947 = vpop.permute.xlu0 %946
      %948 = vrot.lane.b32.xlu0 %v792, 17
      %v949 = vpop.permute.xlu0 %948
      %950 = vrot.lane.b32.xlu0 %v800, 17
      %v951 = vpop.permute.xlu0 %950
      %952 = vrot.lane.b32.xlu0 %v812, 17
      %v953 = vpop.permute.xlu0 %952
      %954 = vrot.lane.b32.xlu0 %v813, 17
      %v955 = vpop.permute.xlu0 %954
      %956 = vrot.lane.b32.xlu0 %v806, 17
      %v957 = vpop.permute.xlu0 %956
      %958 = vrot.lane.b32.xlu0 %v814, 17
      %v959 = vpop.permute.xlu0 %958
      %960 = vrot.lane.b32.xlu0 %v815, 17
      %v961 = vpop.permute.xlu0 %960
      %962 = vrot.lane.b32.xlu0 %v823, 17
      %v963 = vpop.permute.xlu0 %962
      %964 = vrot.lane.b32.xlu0 %v835, 17
      %v965 = vpop.permute.xlu0 %964
      %966 = vrot.lane.b32.xlu0 %v836, 17
      %v967 = vpop.permute.xlu0 %966
      %968 = vrot.lane.b32.xlu0 %v829, 17
      %v969 = vpop.permute.xlu0 %968
      %970 = vrot.lane.b32.xlu0 %v837, 17
      %v971 = vpop.permute.xlu0 %970
      %972 = vrot.lane.b32.xlu0 %v838, 17
      %v973 = vpop.permute.xlu0 %972
      %974 = vrot.lane.b32.xlu0 %v846, 17
      %v975 = vpop.permute.xlu0 %974
      %976 = vrot.lane.b32.xlu0 %v858, 17
      %v977 = vpop.permute.xlu0 %976
      %978 = vrot.lane.b32.xlu0 %v859, 17
      %v979 = vpop.permute.xlu0 %978
      %980 = vrot.lane.b32.xlu0 %v852, 17
      %v981 = vpop.permute.xlu0 %980
      %982 = vrot.lane.b32.xlu0 %v860, 17
      %v983 = vpop.permute.xlu0 %982
      %984 = vrot.lane.b32.xlu0 %v861, 17
      %v985 = vpop.permute.xlu0 %984
      %v986 = vsel %vm681, %v879, %v881
      %v987 = vsel %vm681, %v881, %v883
      %v988 = vsel %vm681, %v885, %v887
      %v989 = vsel %vm681, %v887, %v889
      %v990 = vsel %vm681, %v891, %v893
      %v991 = vsel %vm681, %v893, %v895
      %v992 = vsel %vm681, %v897, %v899
      %v993 = vsel %vm681, %v899, %v901
      %v994 = vsel %vm681, %v903, %v905
      %v995 = vsel %vm681, %v905, %v907
      %v996 = vsel %vm681, %v909, %v911
      %v997 = vsel %vm681, %v911, %v913
      %v998 = vsel %vm681, %v915, %v917
      %v999 = vsel %vm681, %v917, %v919
      %v1000 = vsel %vm681, %v921, %v923
      %v1001 = vsel %vm681, %v923, %v925
      %v1002 = vsel %vm681, %v927, %v929
      %v1003 = vsel %vm681, %v929, %v931
      %v1004 = vsel %vm681, %v933, %v935
      %v1005 = vsel %vm681, %v935, %v937
      %v1006 = vsel %vm681, %v939, %v941
      %v1007 = vsel %vm681, %v941, %v943
      %v1008 = vsel %vm681, %v945, %v947
      %v1009 = vsel %vm681, %v947, %v949
      %v1010 = vsel %vm681, %v951, %v953
      %v1011 = vsel %vm681, %v953, %v955
      %v1012 = vsel %vm681, %v957, %v959
      %v1013 = vsel %vm681, %v959, %v961
      %v1014 = vsel %vm681, %v963, %v965
      %v1015 = vsel %vm681, %v965, %v967
      %v1016 = vsel %vm681, %v969, %v971
      %v1017 = vsel %vm681, %v971, %v973
      %v1018 = vsel %vm681, %v975, %v977
      %v1019 = vsel %vm681, %v977, %v979
      %v1020 = vsel %vm681, %v981, %v983
      %v1021 = vsel %vm681, %v983, %v985
      %vm1058 = vcmask 130048
      %v1060 = vsel %vm1058, %v440, 0
      %v1063 = vsel %vm1058, %v442, 0
      %1065 = vmatprep.subr.mxu0 %v987
      %1066 = vmatpush1.msra.mxu0 %v986
      %1067 = vmatprep.subr.mxu0 %v989
      %1068 = vmatpush1.msra.mxu0 %v988
      %1069 = vmatprep.subr.mxu0 %v991
      %1070 = vmatpush1.msra.mxu0 %v990
      %1071 = vmatprep.subr.mxu0 %v993
      %1072 = vmatpush1.msra.mxu0 %v992
      %1073 = vmatprep.subr.mxu0 %v995
      %1074 = vmatpush1.msra.mxu0 %v994
      %1075 = vmatprep.subr.mxu0 %v997
      %1076 = vmatpush1.msra.mxu0 %v996
      %1077 = vmatprep.subr.mxu0 %v999
      %1078 = vmatpush1.msra.mxu0 %v998
      %1079 = vmatprep.subr.mxu0 %v1001
      %1080 = vmatpush1.msra.mxu0 %v1000
      %1081 = vmatprep.subr.mxu0 %v1003
      %1082 = vmatpush1.msra.mxu0 %v1002
      %1083 = vmatprep.subr.mxu0 %v1005
      %1084 = vmatpush1.msra.mxu0 %v1004
      %1085 = vmatprep.subr.mxu0 %v1007
      %1086 = vmatpush1.msra.mxu0 %v1006
      %1087 = vmatprep.subr.mxu0 %v1009
      %1088 = vmatpush1.msra.mxu0 %v1008
      %1089 = vmatprep.subr.mxu0 %v1011
      %1090 = vmatpush1.msra.mxu0 %v1010
      %1091 = vmatprep.subr.mxu0 %v1013
      %1092 = vmatpush1.msra.mxu0 %v1012
      %1093 = vmatprep.subr.mxu0 %v1015
      %1094 = vmatpush1.msra.mxu0 %v1014
      %1095 = vmatprep.subr.mxu0 %v1017
      %1096 = vmatpush1.msra.mxu0 %v1016
      %1097 = vmatprep.subr.mxu0 %v1019
      %1098 = vmatpush1.msra.mxu0 %v1018
      %1099 = vmatprep.subr.mxu0 %v1021
      %1100 = vmatpush1.msra.mxu0 %v1020
      %1101 = vmatprep.subr.mxu0 0.0
      %1102 = vmatpush1.msra.mxu0 0.0
      %1103 = vmatprep.subr.mxu0 0.0
      %1104 = vmatpush1.msra.mxu0 0.0
      %1105 = vmatprep.subr.mxu0 0.0
      %1106 = vmatpush1.msra.mxu0 0.0
      %1107 = vmatprep.subr.mxu0 0.0
      %1108 = vmatpush1.msra.mxu0 0.0
      %1109 = vmatprep.subr.mxu0 0.0
      %1110 = vmatpush1.msra.mxu0 0.0
      %1111 = vmatprep.subr.mxu0 0.0
      %1112 = vmatpush1.msra.mxu0 0.0
      %1113 = vmatprep.subr.mxu0 0.0
      %1114 = vmatpush1.msra.mxu0 0.0
      %1115 = vmatprep.subr.mxu0 0.0
      %1116 = vmatpush1.msra.mxu0 0.0
      %1117 = vmatprep.subr.mxu0 0.0
      %1118 = vmatpush1.msra.mxu0 0.0
      %1119 = vmatprep.subr.mxu0 0.0
      %1120 = vmatpush1.msra.mxu0 0.0
      %1121 = vmatprep.subr.mxu0 0.0
      %1122 = vmatpush1.msra.mxu0 0.0
      %1123 = vmatprep.subr.mxu0 0.0
      %1124 = vmatpush1.msra.mxu0 0.0
      %1125 = vmatprep.subr.mxu0 0.0
      %1126 = vmatpush1.msra.mxu0 0.0
      %1127 = vmatprep.subr.mxu0 0.0
      %1128 = vmatpush1.msra.mxu0 0.0
      %1129 = vmatprep.mubr.f32.mxu0 %v1060
      %1130 = vmatmul.mubr.f32.gmra.mrb[0].mxu0 %v439
      %v1131 = vpop.f32.mrb[0].mxu0
      %v1132 = vadd.f32 %v865, %v1131
      %v1133 = vpop.f32.mrb[0].mxu0
      %v1134 = vadd.f32 %v865, %v1133
      %1135 = vmatprep.mubr.f32.mxu0 %v1063
      %1136 = vmatmul.mubr.f32.gmra.mrb[0].mxu0 %v441
      %v1137 = vpop.f32.mrb[0].mxu0
      %v1138 = vadd.f32 %v870, %v1137
      %v1139 = vpop.f32.mrb[0].mxu0
      %v1140 = vadd.f32 %v870, %v1139
      %1141 = vdwg.mxu0
      %1143 = vset.pattern.permute.xlu0 0
      %1144 = vperm.xlu0 %1143, %v446
      %v1145 = vpop.permute.xlu0 %1144
      %v1148 = vsel %vm1058, %v445, 0
      %1150 = vmatprep.subr.mxu0 %v1134
      %1151 = vmatpush1.msra.mxu0 %v1132
      %1152 = vmatprep.subr.mxu0 %v1140
      %1153 = vmatpush1.msra.mxu0 %v1138
      %1154 = vmatprep.subr.mxu0 0.0
      %1155 = vmatpush1.msra.mxu0 0.0
      %1156 = vmatprep.subr.mxu0 0.0
      %1157 = vmatpush1.msra.mxu0 0.0
      %1158 = vmatprep.subr.mxu0 0.0
      %1159 = vmatpush1.msra.mxu0 0.0
      %1160 = vmatprep.subr.mxu0 0.0
      %1161 = vmatpush1.msra.mxu0 0.0
      %1162 = vmatprep.subr.mxu0 0.0
      %1163 = vmatpush1.msra.mxu0 0.0
      %1164 = vmatprep.subr.mxu0 0.0
      %1165 = vmatpush1.msra.mxu0 0.0
      %1166 = vmatprep.subr.mxu0 0.0
      %1167 = vmatpush1.msra.mxu0 0.0
      %1168 = vmatprep.subr.mxu0 0.0
      %1169 = vmatpush1.msra.mxu0 0.0
      %1170 = vmatprep.subr.mxu0 0.0
      %1171 = vmatpush1.msra.mxu0 0.0
      %1172 = vmatprep.subr.mxu0 0.0
      %1173 = vmatpush1.msra.mxu0 0.0
      %1174 = vmatprep.subr.mxu0 0.0
      %1175 = vmatpush1.msra.mxu0 0.0
      %1176 = vmatprep.subr.mxu0 0.0
      %1177 = vmatpush1.msra.mxu0 0.0
      %1178 = vmatprep.subr.mxu0 0.0
      %1179 = vmatpush1.msra.mxu0 0.0
      %1180 = vmatprep.subr.mxu0 0.0
      %1181 = vmatpush1.msra.mxu0 0.0
      %1182 = vmatprep.subr.mxu0 0.0
      %1183 = vmatpush1.msra.mxu0 0.0
      %1184 = vmatprep.subr.mxu0 0.0
      %1185 = vmatpush1.msra.mxu0 0.0
      %1186 = vmatprep.subr.mxu0 0.0
      %1187 = vmatpush1.msra.mxu0 0.0
      %1188 = vmatprep.subr.mxu0 0.0
      %1189 = vmatpush1.msra.mxu0 0.0
      %1190 = vmatprep.subr.mxu0 0.0
      %1191 = vmatpush1.msra.mxu0 0.0
      %1192 = vmatprep.subr.mxu0 0.0
      %1193 = vmatpush1.msra.mxu0 0.0
      %1194 = vmatprep.subr.mxu0 0.0
      %1195 = vmatpush1.msra.mxu0 0.0
      %1196 = vmatprep.subr.mxu0 0.0
      %1197 = vmatpush1.msra.mxu0 0.0
      %1198 = vmatprep.subr.mxu0 0.0
      %1199 = vmatpush1.msra.mxu0 0.0
      %1200 = vmatprep.subr.mxu0 0.0
      %1201 = vmatpush1.msra.mxu0 0.0
      %1202 = vmatprep.subr.mxu0 0.0
      %1203 = vmatpush1.msra.mxu0 0.0
      %1204 = vmatprep.subr.mxu0 0.0
      %1205 = vmatpush1.msra.mxu0 0.0
      %1206 = vmatprep.subr.mxu0 0.0
      %1207 = vmatpush1.msra.mxu0 0.0
      %1208 = vmatprep.subr.mxu0 0.0
      %1209 = vmatpush1.msra.mxu0 0.0
      %1210 = vmatprep.subr.mxu0 0.0
      %1211 = vmatpush1.msra.mxu0 0.0
      %1212 = vmatprep.subr.mxu0 0.0
      %1213 = vmatpush1.msra.mxu0 0.0
      %1214 = vmatprep.mubr.f32.mxu0 0.0
      %1215 = vmatmul.mubr.f32.gmra.mrb[0].mxu0 %v1148
      %v1216 = vpop.f32.mrb[0].mxu0
      %v1217 = vadd.f32 %v1145, %v1216
      %v1218 = vpop.f32.mrb[0].mxu0
      %v1219 = vadd.f32 %v1145, %v1218
      %1220 = vdwg.mxu0
      %v1221 = vsub.f32 0.0, %v1217
      %v1222 = vsub.f32 0.0, %v1219
      %v1223 = vmul.f32 %v1221, 1.442695
      %v1224 = vpow.pop %v1223
      %v1225 = vmul.f32 %v1222, 1.442695
      %v1226 = vpow.pop %v1225
      %v1227 = vadd.f32 %v1224, 1.0
      %v1228 = vadd.f32 %v1226, 1.0
      %v1229 = vrcp.pop %v1227
      %v1230 = vrcp.pop %v1228
      %v1231 = vmul.f32 %v1229, %v454
      %v1232 = vmul.f32 %v1230, %v455
      %1233 = vst [vmem:[%s427] sm:$0xff] %v1231
      %1234 = vst [vmem:[%s427 + $0x8] sm:$0xff] %v1232
      %s1235 = scalar_lea.vmem %s411, 16
      %v1236 = vld [vmem:[%s1235] sm:$0xff]
      %v1237 = vld [vmem:[%s1235 + $0x8] sm:$0xff]
      %s1238 = scalar_lea.vmem %s419, 16
      %v1239 = vld [vmem:[%s1238] sm:$0xff]
      %v1240 = vld [vmem:[%s1238 + $0x8] sm:$0xff]
      %v1241 = vmul.f32 %v1239, %v461
      %v1242 = vmul.f32 %v1240, %v461
      %v1243 = vmul.f32 %v1236, %v468
      %v1244 = vmul.f32 %v1237, %v468
      %v1245 = vadd.f32 %v1241, %v1243
      %v1246 = vadd.f32 %v1242, %v1244
      %1247 = vmatprep.subr.mxu0 %v1246
      %1248 = vmatpush1.msra.mxu0 %v1245
      %1249 = vmatprep.subr.mxu0 0.0
      %1250 = vmatpush1.msra.mxu0 0.0
      %1251 = vmatprep.subr.mxu0 0.0
      %1252 = vmatpush1.msra.mxu0 0.0
      %1253 = vmatprep.subr.mxu0 0.0
      %1254 = vmatpush1.msra.mxu0 0.0
      %1255 = vmatprep.subr.mxu0 0.0
      %1256 = vmatpush1.msra.mxu0 0.0
      %1257 = vmatprep.subr.mxu0 0.0
      %1258 = vmatpush1.msra.mxu0 0.0
      %1259 = vmatprep.subr.mxu0 0.0
      %1260 = vmatpush1.msra.mxu0 0.0
      %1261 = vmatprep.subr.mxu0 0.0
      %1262 = vmatpush1.msra.mxu0 0.0
      %1263 = vmatprep.subr.mxu0 0.0
      %1264 = vmatpush1.msra.mxu0 0.0
      %1265 = vmatprep.subr.mxu0 0.0
      %1266 = vmatpush1.msra.mxu0 0.0
      %1267 = vmatprep.subr.mxu0 0.0
      %1268 = vmatpush1.msra.mxu0 0.0
      %1269 = vmatprep.subr.mxu0 0.0
      %1270 = vmatpush1.msra.mxu0 0.0
      %1271 = vmatprep.subr.mxu0 0.0
      %1272 = vmatpush1.msra.mxu0 0.0
      %1273 = vmatprep.subr.mxu0 0.0
      %1274 = vmatpush1.msra.mxu0 0.0
      %1275 = vmatprep.subr.mxu0 0.0
      %1276 = vmatpush1.msra.mxu0 0.0
      %1277 = vmatprep.subr.mxu0 0.0
      %1278 = vmatpush1.msra.mxu0 0.0
      %1279 = vmatprep.subr.mxu0 0.0
      %1280 = vmatpush1.msra.mxu0 0.0
      %1281 = vmatprep.subr.mxu0 0.0
      %1282 = vmatpush1.msra.mxu0 0.0
      %1283 = vmatprep.subr.mxu0 0.0
      %1284 = vmatpush1.msra.mxu0 0.0
      %1285 = vmatprep.subr.mxu0 0.0
      %1286 = vmatpush1.msra.mxu0 0.0
      %1287 = vmatprep.subr.mxu0 0.0
      %1288 = vmatpush1.msra.mxu0 0.0
      %1289 = vmatprep.subr.mxu0 0.0
      %1290 = vmatpush1.msra.mxu0 0.0
      %1291 = vmatprep.subr.mxu0 0.0
      %1292 = vmatpush1.msra.mxu0 0.0
      %1293 = vmatprep.subr.mxu0 0.0
      %1294 = vmatpush1.msra.mxu0 0.0
      %1295 = vmatprep.subr.mxu0 0.0
      %1296 = vmatpush1.msra.mxu0 0.0
      %1297 = vmatprep.subr.mxu0 0.0
      %1298 = vmatpush1.msra.mxu0 0.0
      %1299 = vmatprep.subr.mxu0 0.0
      %1300 = vmatpush1.msra.mxu0 0.0
      %1301 = vmatprep.subr.mxu0 0.0
      %1302 = vmatpush1.msra.mxu0 0.0
      %1303 = vmatprep.subr.mxu0 0.0
      %1304 = vmatpush1.msra.mxu0 0.0
      %1305 = vmatprep.subr.mxu0 0.0
      %1306 = vmatpush1.msra.mxu0 0.0
      %1307 = vmatprep.subr.mxu0 0.0
      %1308 = vmatpush1.msra.mxu0 0.0
      %1309 = vmatprep.subr.mxu0 0.0
      %1310 = vmatpush1.msra.mxu0 0.0
      %1311 = vmatprep.mubr.f32.mxu0 0.0
      %1312 = vmatmul.mubr.f32.gmra.mrb[0].mxu0 %v486
      %v1313 = vpop.f32.mrb[0].mxu0
      %v1314 = vadd.f32 %v477, %v1313
      %v1315 = vpop.f32.mrb[0].mxu0
      %v1316 = vadd.f32 %v477, %v1315
      %1317 = vmatprep.mubr.f32.mxu0 0.0
      %1318 = vmatmul.mubr.f32.gmra.mrb[0].mxu0 %v489
      %v1319 = vpop.f32.mrb[0].mxu0
      %v1320 = vadd.f32 %v482, %v1319
      %v1321 = vpop.f32.mrb[0].mxu0
      %v1322 = vadd.f32 %v482, %v1321
      %1323 = vdwg.mxu0
      %1324 = vst [vmem:[#allocation2 + $0x8] sm:$0xff] %v1314
      %1325 = vst [vmem:[#allocation2 + $0x10] sm:$0xff] %v1316
      %1326 = vst [vmem:[#allocation2 + $0x28] sm:$0xff] %v1320
      %1327 = vst [vmem:[#allocation2 + $0x30] sm:$0xff] %v1322
      %v1328 = vld [vmem:[#allocation2] sm:$0xff]
      %v1329 = vld [vmem:[#allocation2 + $0x8] sm:$0xff]
      %v1330 = vld [vmem:[#allocation2 + $0x10] sm:$0xff]
      %v1331 = vld [vmem:[#allocation2 + $0x20] sm:$0xff]
      %v1332 = vld [vmem:[#allocation2 + $0x28] sm:$0xff]
      %v1333 = vld [vmem:[#allocation2 + $0x30] sm:$0xff]
      %v1334 = vmul.f32 %v1328, %v588
      %v1335 = vmul.f32 %v1329, %v592
      %v1336 = vmul.f32 %v1330, %v590
      %v1337 = vmul.f32 %v1331, %v588
      %v1338 = vmul.f32 %v1332, %v592
      %v1339 = vmul.f32 %v1333, %v590
      %v1340 = vmul.f32 %v1328, %v612
      %v1341 = vmul.f32 %v1329, %v616
      %v1342 = vmul.f32 %v1330, %v614
      %v1343 = vmul.f32 %v1331, %v612
      %v1344 = vmul.f32 %v1332, %v616
      %v1345 = vmul.f32 %v1333, %v614
      %v1346 = vmul.f32 %v1328, %v627
      %v1347 = vmul.f32 %v1329, %v631
      %v1348 = vmul.f32 %v1330, %v629
      %v1349 = vmul.f32 %v1331, %v627
      %v1350 = vmul.f32 %v1332, %v631
      %v1351 = vmul.f32 %v1333, %v629
      %v1352 = vld [vmem:[#allocation2 + $0x8] sm:$0xff]
      %v1353 = vld [vmem:[#allocation2 + $0x10] sm:$0xff]
      %v1354 = vld [vmem:[#allocation2 + $0x18] sm:$0xff]
      %v1355 = vld [vmem:[#allocation2 + $0x28] sm:$0xff]
      %v1356 = vld [vmem:[#allocation2 + $0x30] sm:$0xff]
      %v1357 = vld [vmem:[#allocation2 + $0x38] sm:$0xff]
      %v1358 = vmul.f32 %v1352, %v648
      %v1359 = vmul.f32 %v1353, %v652
      %v1360 = vmul.f32 %v1354, %v650
      %v1361 = vmul.f32 %v1355, %v648
      %v1362 = vmul.f32 %v1356, %v652
      %v1363 = vmul.f32 %v1357, %v650
      %v1364 = vmul.f32 %v1352, %v663
      %v1365 = vmul.f32 %v1353, %v667
      %v1366 = vmul.f32 %v1354, %v665
      %v1367 = vmul.f32 %v1355, %v663
      %v1368 = vmul.f32 %v1356, %v667
      %v1369 = vmul.f32 %v1357, %v665
      %v1370 = vmul.f32 %v1352, %v678
      %v1371 = vmul.f32 %v1353, %v682
      %v1372 = vmul.f32 %v1354, %v680
      %v1373 = vmul.f32 %v1355, %v678
      %v1374 = vmul.f32 %v1356, %v682
      %v1375 = vmul.f32 %v1357, %v680
      %1382 = vrot.lane.b32.xlu0 %v1328, 127
      %v1383 = vpop.permute.xlu0 %1382
      %1384 = vrot.lane.b32.xlu0 %v1329, 127
      %v1385 = vpop.permute.xlu0 %1384
      %1386 = vrot.lane.b32.xlu0 %v1330, 127
      %v1387 = vpop.permute.xlu0 %1386
      %1388 = vrot.lane.b32.xlu0 %v1331, 127
      %v1389 = vpop.permute.xlu0 %1388
      %1390 = vrot.lane.b32.xlu0 %v1332, 127
      %v1391 = vpop.permute.xlu0 %1390
      %1392 = vrot.lane.b32.xlu0 %v1333, 127
      %v1393 = vpop.permute.xlu0 %1392
      %v1394 = vsel %vm630, %v1383, %v1385
      %v1395 = vsel %vm630, %v1385, %v1387
      %v1396 = vsel %vm630, %v1389, %v1391
      %v1397 = vsel %vm630, %v1391, %v1393
      %1404 = vrot.lane.b32.xlu0 %v1340, 126
      %v1405 = vpop.permute.xlu0 %1404
      %1406 = vrot.lane.b32.xlu0 %v1341, 126
      %v1407 = vpop.permute.xlu0 %1406
      %1408 = vrot.lane.b32.xlu0 %v1342, 126
      %v1409 = vpop.permute.xlu0 %1408
      %1410 = vrot.lane.b32.xlu0 %v1343, 126
      %v1411 = vpop.permute.xlu0 %1410
      %1412 = vrot.lane.b32.xlu0 %v1344, 126
      %v1413 = vpop.permute.xlu0 %1412
      %1414 = vrot.lane.b32.xlu0 %v1345, 126
      %v1415 = vpop.permute.xlu0 %1414
      %v1416 = vsel %vm732, %v1405, %v1407
      %v1417 = vsel %vm732, %v1407, %v1409
      %v1418 = vsel %vm732, %v1411, %v1413
      %v1419 = vsel %vm732, %v1413, %v1415
      %1426 = vrot.lane.b32.xlu0 %v1346, 112
      %v1427 = vpop.permute.xlu0 %1426
      %1428 = vrot.lane.b32.xlu0 %v1347, 112
      %v1429 = vpop.permute.xlu0 %1428
      %1430 = vrot.lane.b32.xlu0 %v1348, 112
      %v1431 = vpop.permute.xlu0 %1430
      %1432 = vrot.lane.b32.xlu0 %v1349, 112
      %v1433 = vpop.permute.xlu0 %1432
      %1434 = vrot.lane.b32.xlu0 %v1350, 112
      %v1435 = vpop.permute.xlu0 %1434
      %1436 = vrot.lane.b32.xlu0 %v1351, 112
      %v1437 = vpop.permute.xlu0 %1436
      %v1438 = vsel %vm755, %v1427, %v1429
      %v1439 = vsel %vm755, %v1429, %v1431
      %v1440 = vsel %vm755, %v1433, %v1435
      %v1441 = vsel %vm755, %v1435, %v1437
      %1442 = vrot.lane.b32.xlu0 %v1329, 111
      %v1443 = vpop.permute.xlu0 %1442
      %1444 = vrot.lane.b32.xlu0 %v1330, 111
      %v1445 = vpop.permute.xlu0 %1444
      %1446 = vrot.lane.b32.xlu0 %v1332, 111
      %v1447 = vpop.permute.xlu0 %1446
      %1448 = vrot.lane.b32.xlu0 %v1333, 111
      %v1449 = vpop.permute.xlu0 %1448
      %v1450 = vsel %vm591, %v1443, %v1445
      %v1451 = vsel %vm591, %v1447, %v1449
      %1458 = vrot.lane.b32.xlu0 %v1358, 110
      %v1459 = vpop.permute.xlu0 %1458
      %1460 = vrot.lane.b32.xlu0 %v1359, 110
      %v1461 = vpop.permute.xlu0 %1460
      %1462 = vrot.lane.b32.xlu0 %v1360, 110
      %v1463 = vpop.permute.xlu0 %1462
      %1464 = vrot.lane.b32.xlu0 %v1361, 110
      %v1465 = vpop.permute.xlu0 %1464
      %1466 = vrot.lane.b32.xlu0 %v1362, 110
      %v1467 = vpop.permute.xlu0 %1466
      %1468 = vrot.lane.b32.xlu0 %v1363, 110
      %v1469 = vpop.permute.xlu0 %1468
      %v1470 = vsel %vm788, %v1459, %v1461
      %v1471 = vsel %vm788, %v1461, %v1463
      %v1472 = vsel %vm788, %v1465, %v1467
      %v1473 = vsel %vm788, %v1467, %v1469
      %1480 = vrot.lane.b32.xlu0 %v1364, 96
      %v1481 = vpop.permute.xlu0 %1480
      %1482 = vrot.lane.b32.xlu0 %v1365, 96
      %v1483 = vpop.permute.xlu0 %1482
      %1484 = vrot.lane.b32.xlu0 %v1366, 96
      %v1485 = vpop.permute.xlu0 %1484
      %1486 = vrot.lane.b32.xlu0 %v1367, 96
      %v1487 = vpop.permute.xlu0 %1486
      %1488 = vrot.lane.b32.xlu0 %v1368, 96
      %v1489 = vpop.permute.xlu0 %1488
      %1490 = vrot.lane.b32.xlu0 %v1369, 96
      %v1491 = vpop.permute.xlu0 %1490
      %v1492 = vsel %vm811, %v1481, %v1483
      %v1493 = vsel %vm811, %v1483, %v1485
      %v1494 = vsel %vm811, %v1487, %v1489
      %v1495 = vsel %vm811, %v1489, %v1491
      %1502 = vrot.lane.b32.xlu0 %v1352, 95
      %v1503 = vpop.permute.xlu0 %1502
      %1504 = vrot.lane.b32.xlu0 %v1353, 95
      %v1505 = vpop.permute.xlu0 %1504
      %1506 = vrot.lane.b32.xlu0 %v1354, 95
      %v1507 = vpop.permute.xlu0 %1506
      %1508 = vrot.lane.b32.xlu0 %v1355, 95
      %v1509 = vpop.permute.xlu0 %1508
      %1510 = vrot.lane.b32.xlu0 %v1356, 95
      %v1511 = vpop.permute.xlu0 %1510
      %1512 = vrot.lane.b32.xlu0 %v1357, 95
      %v1513 = vpop.permute.xlu0 %1512
      %v1514 = vsel %vm834, %v1503, %v1505
      %v1515 = vsel %vm834, %v1505, %v1507
      %v1516 = vsel %vm834, %v1509, %v1511
      %v1517 = vsel %vm834, %v1511, %v1513
      %1524 = vrot.lane.b32.xlu0 %v1370, 94
      %v1525 = vpop.permute.xlu0 %1524
      %1526 = vrot.lane.b32.xlu0 %v1371, 94
      %v1527 = vpop.permute.xlu0 %1526
      %1528 = vrot.lane.b32.xlu0 %v1372, 94
      %v1529 = vpop.permute.xlu0 %1528
      %1530 = vrot.lane.b32.xlu0 %v1373, 94
      %v1531 = vpop.permute.xlu0 %1530
      %1532 = vrot.lane.b32.xlu0 %v1374, 94
      %v1533 = vpop.permute.xlu0 %1532
      %1534 = vrot.lane.b32.xlu0 %v1375, 94
      %v1535 = vpop.permute.xlu0 %1534
      %v1536 = vsel %vm857, %v1525, %v1527
      %v1537 = vsel %vm857, %v1527, %v1529
      %v1538 = vsel %vm857, %v1531, %v1533
      %v1539 = vsel %vm857, %v1533, %v1535
      %1546 = vrot.lane.b32.xlu0 %v1334, 17
      %v1547 = vpop.permute.xlu0 %1546
      %1548 = vrot.lane.b32.xlu0 %v1335, 17
      %v1549 = vpop.permute.xlu0 %1548
      %1550 = vrot.lane.b32.xlu0 %v1336, 17
      %v1551 = vpop.permute.xlu0 %1550
      %1552 = vrot.lane.b32.xlu0 %v1337, 17
      %v1553 = vpop.permute.xlu0 %1552
      %1554 = vrot.lane.b32.xlu0 %v1338, 17
      %v1555 = vpop.permute.xlu0 %1554
      %1556 = vrot.lane.b32.xlu0 %v1339, 17
      %v1557 = vpop.permute.xlu0 %1556
      %1558 = vrot.lane.b32.xlu0 %v1394, 17
      %v1559 = vpop.permute.xlu0 %1558
      %1560 = vrot.lane.b32.xlu0 %v1395, 17
      %v1561 = vpop.permute.xlu0 %1560
      %1562 = vrot.lane.b32.xlu0 %v1387, 17
      %v1563 = vpop.permute.xlu0 %1562
      %1564 = vrot.lane.b32.xlu0 %v1396, 17
      %v1565 = vpop.permute.xlu0 %1564
      %1566 = vrot.lane.b32.xlu0 %v1397, 17
      %v1567 = vpop.permute.xlu0 %1566
      %1568 = vrot.lane.b32.xlu0 %v1393, 17
      %v1569 = vpop.permute.xlu0 %1568
      %1570 = vrot.lane.b32.xlu0 %v1416, 17
      %v1571 = vpop.permute.xlu0 %1570
      %1572 = vrot.lane.b32.xlu0 %v1417, 17
      %v1573 = vpop.permute.xlu0 %1572
      %1574 = vrot.lane.b32.xlu0 %v1409, 17
      %v1575 = vpop.permute.xlu0 %1574
      %1576 = vrot.lane.b32.xlu0 %v1418, 17
      %v1577 = vpop.permute.xlu0 %1576
      %1578 = vrot.lane.b32.xlu0 %v1419, 17
      %v1579 = vpop.permute.xlu0 %1578
      %1580 = vrot.lane.b32.xlu0 %v1415, 17
      %v1581 = vpop.permute.xlu0 %1580
      %1582 = vrot.lane.b32.xlu0 %v1438, 17
      %v1583 = vpop.permute.xlu0 %1582
      %1584 = vrot.lane.b32.xlu0 %v1439, 17
      %v1585 = vpop.permute.xlu0 %1584
      %1586 = vrot.lane.b32.xlu0 %v1431, 17
      %v1587 = vpop.permute.xlu0 %1586
      %1588 = vrot.lane.b32.xlu0 %v1440, 17
      %v1589 = vpop.permute.xlu0 %1588
      %1590 = vrot.lane.b32.xlu0 %v1441, 17
      %v1591 = vpop.permute.xlu0 %1590
      %1592 = vrot.lane.b32.xlu0 %v1437, 17
      %v1593 = vpop.permute.xlu0 %1592
      %1594 = vrot.lane.b32.xlu0 %v1443, 17
      %v1595 = vpop.permute.xlu0 %1594
      %1596 = vrot.lane.b32.xlu0 %v1450, 17
      %v1597 = vpop.permute.xlu0 %1596
      %1598 = vrot.lane.b32.xlu0 %v1445, 17
      %v1599 = vpop.permute.xlu0 %1598
      %1600 = vrot.lane.b32.xlu0 %v1447, 17
      %v1601 = vpop.permute.xlu0 %1600
      %1602 = vrot.lane.b32.xlu0 %v1451, 17
      %v1603 = vpop.permute.xlu0 %1602
      %1604 = vrot.lane.b32.xlu0 %v1449, 17
      %v1605 = vpop.permute.xlu0 %1604
      %1606 = vrot.lane.b32.xlu0 %v1459, 17
      %v1607 = vpop.permute.xlu0 %1606
      %1608 = vrot.lane.b32.xlu0 %v1470, 17
      %v1609 = vpop.permute.xlu0 %1608
      %1610 = vrot.lane.b32.xlu0 %v1471, 17
      %v1611 = vpop.permute.xlu0 %1610
      %1612 = vrot.lane.b32.xlu0 %v1465, 17
      %v1613 = vpop.permute.xlu0 %1612
      %1614 = vrot.lane.b32.xlu0 %v1472, 17
      %v1615 = vpop.permute.xlu0 %1614
      %1616 = vrot.lane.b32.xlu0 %v1473, 17
      %v1617 = vpop.permute.xlu0 %1616
      %1618 = vrot.lane.b32.xlu0 %v1481, 17
      %v1619 = vpop.permute.xlu0 %1618
      %1620 = vrot.lane.b32.xlu0 %v1492, 17
      %v1621 = vpop.permute.xlu0 %1620
      %1622 = vrot.lane.b32.xlu0 %v1493, 17
      %v1623 = vpop.permute.xlu0 %1622
      %1624 = vrot.lane.b32.xlu0 %v1487, 17
      %v1625 = vpop.permute.xlu0 %1624
      %1626 = vrot.lane.b32.xlu0 %v1494, 17
      %v1627 = vpop.permute.xlu0 %1626
      %1628 = vrot.lane.b32.xlu0 %v1495, 17
      %v1629 = vpop.permute.xlu0 %1628
      %1630 = vrot.lane.b32.xlu0 %v1503, 17
      %v1631 = vpop.permute.xlu0 %1630
      %1632 = vrot.lane.b32.xlu0 %v1514, 17
      %v1633 = vpop.permute.xlu0 %1632
      %1634 = vrot.lane.b32.xlu0 %v1515, 17
      %v1635 = vpop.permute.xlu0 %1634
      %1636 = vrot.lane.b32.xlu0 %v1509, 17
      %v1637 = vpop.permute.xlu0 %1636
      %1638 = vrot.lane.b32.xlu0 %v1516, 17
      %v1639 = vpop.permute.xlu0 %1638
      %1640 = vrot.lane.b32.xlu0 %v1517, 17
      %v1641 = vpop.permute.xlu0 %1640
      %1642 = vrot.lane.b32.xlu0 %v1525, 17
      %v1643 = vpop.permute.xlu0 %1642
      %1644 = vrot.lane.b32.xlu0 %v1536, 17
      %v1645 = vpop.permute.xlu0 %1644
      %1646 = vrot.lane.b32.xlu0 %v1537, 17
      %v1647 = vpop.permute.xlu0 %1646
      %1648 = vrot.lane.b32.xlu0 %v1531, 17
      %v1649 = vpop.permute.xlu0 %1648
      %1650 = vrot.lane.b32.xlu0 %v1538, 17
      %v1651 = vpop.permute.xlu0 %1650
      %1652 = vrot.lane.b32.xlu0 %v1539, 17
      %v1653 = vpop.permute.xlu0 %1652
      %v1654 = vsel %vm681, %v1547, %v1549
      %v1655 = vsel %vm681, %v1549, %v1551
      %v1656 = vsel %vm681, %v1553, %v1555
      %v1657 = vsel %vm681, %v1555, %v1557
      %v1658 = vsel %vm681, %v1559, %v1561
      %v1659 = vsel %vm681, %v1561, %v1563
      %v1660 = vsel %vm681, %v1565, %v1567
      %v1661 = vsel %vm681, %v1567, %v1569
      %v1662 = vsel %vm681, %v1571, %v1573
      %v1663 = vsel %vm681, %v1573, %v1575
      %v1664 = vsel %vm681, %v1577, %v1579
      %v1665 = vsel %vm681, %v1579, %v1581
      %v1666 = vsel %vm681, %v1583, %v1585
      %v1667 = vsel %vm681, %v1585, %v1587
      %v1668 = vsel %vm681, %v1589, %v1591
      %v1669 = vsel %vm681, %v1591, %v1593
      %v1670 = vsel %vm681, %v1595, %v1597
      %v1671 = vsel %vm681, %v1597, %v1599
      %v1672 = vsel %vm681, %v1601, %v1603
      %v1673 = vsel %vm681, %v1603, %v1605
      %v1674 = vsel %vm681, %v1607, %v1609
      %v1675 = vsel %vm681, %v1609, %v1611
      %v1676 = vsel %vm681, %v1613, %v1615
      %v1677 = vsel %vm681, %v1615, %v1617
      %v1678 = vsel %vm681, %v1619, %v1621
      %v1679 = vsel %vm681, %v1621, %v1623
      %v1680 = vsel %vm681, %v1625, %v1627
      %v1681 = vsel %vm681, %v1627, %v1629
      %v1682 = vsel %vm681, %v1631, %v1633
      %v1683 = vsel %vm681, %v1633, %v1635
      %v1684 = vsel %vm681, %v1637, %v1639
      %v1685 = vsel %vm681, %v1639, %v1641
      %v1686 = vsel %vm681, %v1643, %v1645
      %v1687 = vsel %vm681, %v1645, %v1647
      %v1688 = vsel %vm681, %v1649, %v1651
      %v1689 = vsel %vm681, %v1651, %v1653
      %1726 = vmatprep.subr.mxu0 %v1655
      %1727 = vmatpush1.msra.mxu0 %v1654
      %1728 = vmatprep.subr.mxu0 %v1657
      %1729 = vmatpush1.msra.mxu0 %v1656
      %1730 = vmatprep.subr.mxu0 %v1659
      %1731 = vmatpush1.msra.mxu0 %v1658
      %1732 = vmatprep.subr.mxu0 %v1661
      %1733 = vmatpush1.msra.mxu0 %v1660
      %1734 = vmatprep.subr.mxu0 %v1663
      %1735 = vmatpush1.msra.mxu0 %v1662
      %1736 = vmatprep.subr.mxu0 %v1665
      %1737 = vmatpush1.msra.mxu0 %v1664
      %1738 = vmatprep.subr.mxu0 %v1667
      %1739 = vmatpush1.msra.mxu0 %v1666
      %1740 = vmatprep.subr.mxu0 %v1669
      %1741 = vmatpush1.msra.mxu0 %v1668
      %1742 = vmatprep.subr.mxu0 %v1671
      %1743 = vmatpush1.msra.mxu0 %v1670
      %1744 = vmatprep.subr.mxu0 %v1673
      %1745 = vmatpush1.msra.mxu0 %v1672
      %1746 = vmatprep.subr.mxu0 %v1675
      %1747 = vmatpush1.msra.mxu0 %v1674
      %1748 = vmatprep.subr.mxu0 %v1677
      %1749 = vmatpush1.msra.mxu0 %v1676
      %1750 = vmatprep.subr.mxu0 %v1679
      %1751 = vmatpush1.msra.mxu0 %v1678
      %1752 = vmatprep.subr.mxu0 %v1681
      %1753 = vmatpush1.msra.mxu0 %v1680
      %1754 = vmatprep.subr.mxu0 %v1683
      %1755 = vmatpush1.msra.mxu0 %v1682
      %1756 = vmatprep.subr.mxu0 %v1685
      %1757 = vmatpush1.msra.mxu0 %v1684
      %1758 = vmatprep.subr.mxu0 %v1687
      %1759 = vmatpush1.msra.mxu0 %v1686
      %1760 = vmatprep.subr.mxu0 %v1689
      %1761 = vmatpush1.msra.mxu0 %v1688
      %1762 = vmatprep.subr.mxu0 0.0
      %1763 = vmatpush1.msra.mxu0 0.0
      %1764 = vmatprep.subr.mxu0 0.0
      %1765 = vmatpush1.msra.mxu0 0.0
      %1766 = vmatprep.subr.mxu0 0.0
      %1767 = vmatpush1.msra.mxu0 0.0
      %1768 = vmatprep.subr.mxu0 0.0
      %1769 = vmatpush1.msra.mxu0 0.0
      %1770 = vmatprep.subr.mxu0 0.0
      %1771 = vmatpush1.msra.mxu0 0.0
      %1772 = vmatprep.subr.mxu0 0.0
      %1773 = vmatpush1.msra.mxu0 0.0
      %1774 = vmatprep.subr.mxu0 0.0
      %1775 = vmatpush1.msra.mxu0 0.0
      %1776 = vmatprep.subr.mxu0 0.0
      %1777 = vmatpush1.msra.mxu0 0.0
      %1778 = vmatprep.subr.mxu0 0.0
      %1779 = vmatpush1.msra.mxu0 0.0
      %1780 = vmatprep.subr.mxu0 0.0
      %1781 = vmatpush1.msra.mxu0 0.0
      %1782 = vmatprep.subr.mxu0 0.0
      %1783 = vmatpush1.msra.mxu0 0.0
      %1784 = vmatprep.subr.mxu0 0.0
      %1785 = vmatpush1.msra.mxu0 0.0
      %1786 = vmatprep.subr.mxu0 0.0
      %1787 = vmatpush1.msra.mxu0 0.0
      %1788 = vmatprep.subr.mxu0 0.0
      %1789 = vmatpush1.msra.mxu0 0.0
      %1790 = vmatprep.mubr.f32.mxu0 %v1060
      %1791 = vmatmul.mubr.f32.gmra.mrb[0].mxu0 %v439
      %v1792 = vpop.f32.mrb[0].mxu0
      %v1793 = vadd.f32 %v865, %v1792
      %v1794 = vpop.f32.mrb[0].mxu0
      %v1795 = vadd.f32 %v865, %v1794
      %1796 = vmatprep.mubr.f32.mxu0 %v1063
      %1797 = vmatmul.mubr.f32.gmra.mrb[0].mxu0 %v441
      %v1798 = vpop.f32.mrb[0].mxu0
      %v1799 = vadd.f32 %v870, %v1798
      %v1800 = vpop.f32.mrb[0].mxu0
      %v1801 = vadd.f32 %v870, %v1800
      %1802 = vdwg.mxu0
      %1803 = vmatprep.subr.mxu0 %v1795
      %1804 = vmatpush1.msra.mxu0 %v1793
      %1805 = vmatprep.subr.mxu0 %v1801
      %1806 = vmatpush1.msra.mxu0 %v1799
      %1807 = vmatprep.subr.mxu0 0.0
      %1808 = vmatpush1.msra.mxu0 0.0
      %1809 = vmatprep.subr.mxu0 0.0
      %1810 = vmatpush1.msra.mxu0 0.0
      %1811 = vmatprep.subr.mxu0 0.0
      %1812 = vmatpush1.msra.mxu0 0.0
      %1813 = vmatprep.subr.mxu0 0.0
      %1814 = vmatpush1.msra.mxu0 0.0
      %1815 = vmatprep.subr.mxu0 0.0
      %1816 = vmatpush1.msra.mxu0 0.0
      %1817 = vmatprep.subr.mxu0 0.0
      %1818 = vmatpush1.msra.mxu0 0.0
      %1819 = vmatprep.subr.mxu0 0.0
      %1820 = vmatpush1.msra.mxu0 0.0
      %1821 = vmatprep.subr.mxu0 0.0
      %1822 = vmatpush1.msra.mxu0 0.0
      %1823 = vmatprep.subr.mxu0 0.0
      %1824 = vmatpush1.msra.mxu0 0.0
      %1825 = vmatprep.subr.mxu0 0.0
      %1826 = vmatpush1.msra.mxu0 0.0
      %1827 = vmatprep.subr.mxu0 0.0
      %1828 = vmatpush1.msra.mxu0 0.0
      %1829 = vmatprep.subr.mxu0 0.0
      %1830 = vmatpush1.msra.mxu0 0.0
      %1831 = vmatprep.subr.mxu0 0.0
      %1832 = vmatpush1.msra.mxu0 0.0
      %1833 = vmatprep.subr.mxu0 0.0
      %1834 = vmatpush1.msra.mxu0 0.0
      %1835 = vmatprep.subr.mxu0 0.0
      %1836 = vmatpush1.msra.mxu0 0.0
      %1837 = vmatprep.subr.mxu0 0.0
      %1838 = vmatpush1.msra.mxu0 0.0
      %1839 = vmatprep.subr.mxu0 0.0
      %1840 = vmatpush1.msra.mxu0 0.0
      %1841 = vmatprep.subr.mxu0 0.0
      %1842 = vmatpush1.msra.mxu0 0.0
      %1843 = vmatprep.subr.mxu0 0.0
      %1844 = vmatpush1.msra.mxu0 0.0
      %1845 = vmatprep.subr.mxu0 0.0
      %1846 = vmatpush1.msra.mxu0 0.0
      %1847 = vmatprep.subr.mxu0 0.0
      %1848 = vmatpush1.msra.mxu0 0.0
      %1849 = vmatprep.subr.mxu0 0.0
      %1850 = vmatpush1.msra.mxu0 0.0
      %1851 = vmatprep.subr.mxu0 0.0
      %1852 = vmatpush1.msra.mxu0 0.0
      %1853 = vmatprep.subr.mxu0 0.0
      %1854 = vmatpush1.msra.mxu0 0.0
      %1855 = vmatprep.subr.mxu0 0.0
      %1856 = vmatpush1.msra.mxu0 0.0
      %1857 = vmatprep.subr.mxu0 0.0
      %1858 = vmatpush1.msra.mxu0 0.0
      %1859 = vmatprep.subr.mxu0 0.0
      %1860 = vmatpush1.msra.mxu0 0.0
      %1861 = vmatprep.subr.mxu0 0.0
      %1862 = vmatpush1.msra.mxu0 0.0
      %1863 = vmatprep.subr.mxu0 0.0
      %1864 = vmatpush1.msra.mxu0 0.0
      %1865 = vmatprep.subr.mxu0 0.0
      %1866 = vmatpush1.msra.mxu0 0.0
      %1867 = vmatprep.mubr.f32.mxu0 0.0
      %1868 = vmatmul.mubr.f32.gmra.mrb[0].mxu0 %v1148
      %v1869 = vpop.f32.mrb[0].mxu0
      %v1870 = vadd.f32 %v1145, %v1869
      %v1871 = vpop.f32.mrb[0].mxu0
      %v1872 = vadd.f32 %v1145, %v1871
      %1873 = vdwg.mxu0
      %v1874 = vsub.f32 0.0, %v1870
      %v1875 = vsub.f32 0.0, %v1872
      %v1876 = vmul.f32 %v1874, 1.442695
      %v1877 = vpow.pop %v1876
      %v1878 = vmul.f32 %v1875, 1.442695
      %v1879 = vpow.pop %v1878
      %v1880 = vadd.f32 %v1877, 1.0
      %v1881 = vadd.f32 %v1879, 1.0
      %v1882 = vrcp.pop %v1880
      %v1883 = vrcp.pop %v1881
      %v1884 = vmul.f32 %v1882, %v1236
      %v1885 = vmul.f32 %v1883, %v1237
      %s1886 = scalar_lea.vmem %s427, 16
      %1887 = vst [vmem:[%s1886] sm:$0xff] %v1884
      %1888 = vst [vmem:[%s1886 + $0x8] sm:$0xff] %v1885
      %p1889 = scmp.lt.s32.totalorder %s22, 3
      %s1890 = scalar_select %p1889, %s22, 3
      %s1891 = smul.addr %s1890, 4
      %s1892 = smul.addr %s1891, 8
      %s1893 = scalar_lea.vmem %s11, %s1892
      // Predicated region
      $region65: #{lmodule_forward.1} parent=63 // pred_check
        %p1894 = pneg %p287
      $region66: #{lmodule_forward.1} parent=63 // pred_check_branch
        %1896 = sbr.rel (%p1894) target = $region68
      $region67: #{lmodule_forward.1} parent=63 // pred_region
        _
      $region68: #{lmodule_forward.1} parent=63 // pred_fallthru
        _
    $region64: #{lmodule_forward.1} parent=5 // pred_fallthru
      _
    %p1897 = scmp.le.s32.totalorder 2, %s17
    // Predicated region
    $region69: #{lmodule_forward.1} parent=5 // pred_check
      %p1898 = pneg %p1897
    $region70: #{lmodule_forward.1} parent=5 // pred_check_branch
      %1900 = sbr.rel (%p1898) target = $region72
    $region71: #{lmodule_forward.1} parent=5 // pred_region
      %s1901 = ssub.s32 %s17, 2
      // Predicated region
      $region73: #{lmodule_forward.1} parent=71 // pred_check
        %p1902 = pneg %p293
      $region74: #{lmodule_forward.1} parent=71 // pred_check_branch
        %1904 = sbr.rel (%p1902) target = $region76
      $region75: #{lmodule_forward.1} parent=71 // pred_region
        %p1905 = scmp.lt.s32.totalorder %s23, 3
        %s1906 = scalar_select %p1905, %s23, 3
        %s1907 = smul.addr %s1906, 4
        %s1908 = smul.addr %s1907, 8
        %s1909 = scalar_lea.vmem %s11, %s1908
      $region76: #{lmodule_forward.1} parent=71 // pred_fallthru
        _
    $region72: #{lmodule_forward.1} parent=5 // pred_fallthru
      _
  $region6: #{lmodule_forward.1} parent=0 // loop_footer
    %s21 = sadd.s32 1, %s17
  $region7: #{lmodule_forward.1} parent=0 // loop_footer_branch
    %16 = sbr.rel target = $region3
  $region8: #{lmodule_forward.1} parent=0 // loop_exit
    _

</llo_original>
